<compile_context>
chip_gen: v6e
topology: v6e:2x2x1
jax: 0.10.0
libtpu: 0.0.40
codegen_flags: <defaults>
</compile_context>

<pallas_src>
import functools

import jax
import jax.numpy as jnp
from jax.experimental import pallas as pl
from jax.experimental.pallas import tpu as pltpu


def _round_up(x, m):
    return ((x + m - 1) // m) * m


def _fit_tile(n_pad, target):
    """Largest multiple of 128 <= target that divides n_pad (n_pad % 128 == 0)."""
    t = min(target, n_pad)
    while n_pad % t != 0:
        t -= 128
    return t


def _vmem_limit_bytes(est_bytes):
    """Generation-aware VMEM limit: 2x the estimated need, clamped to physical - headroom."""
    cap = 128 * 1024 * 1024
    try:
        cap = int(pltpu.get_tpu_info().vmem_capacity_bytes)
    except Exception:
        pass  # fall back to the v5e/v6e physical size; min() below keeps v7x safe anyway
    lo = 32 * 1024 * 1024
    hi = max(lo, cap - 16 * 1024 * 1024)          # leave Mosaic-internal headroom
    return int(min(max(lo, 2 * est_bytes), hi))


def _gcn_agg_kernel(a_ref, s_ref, d_ref, b_ref, o_ref, acc_ref, *, tk):
    """One GCN layer aggregation: out_rows = d_rows * ((A+2I) @ S)_rows + b."""
    k = pl.program_id(1)
    nk = pl.num_programs(1)

    @pl.when(k == 0)
    def _():
        acc_ref[...] = jnp.zeros_like(acc_ref)

    # int8 -> bf16 upcast is VPU filler that hides under the A-tile DMA.
    a_bf16 = a_ref[...].astype(jnp.bfloat16)
    k0 = pl.multiple_of(k * tk, tk)
    acc_ref[...] += jnp.dot(a_bf16, s_ref[pl.ds(k0, tk), :],
                            preferred_element_type=jnp.float32)

    @pl.when(k == nk - 1)
    def _():
        o_ref[...] = (d_ref[...] * acc_ref[...] + b_ref[...]).astype(o_ref.dtype)


def gcn_agg_pallas(a_i8, d, s, b, *, out_dtype=jnp.float32,
                   tm_target=512, tk_target=1024):
    """out = d ⊙ ((A+2I) @ S) + b   with A int8, S bf16, f32 accumulation."""
    n_pad = a_i8.shape[0]
    h = s.shape[1]
    tm = _fit_tile(n_pad, tm_target)
    tk = _fit_tile(n_pad, tk_target)
    grid = (n_pad // tm, n_pad // tk)   # (row tiles [parallel], reduction tiles [arbitrary])

    flops = 2 * n_pad * n_pad * h
    bytes_accessed = (n_pad * n_pad          # A+2I int8, streamed once
                      + n_pad * h * 2        # S (bf16, resident)
                      + n_pad * h * 4        # output
                      + n_pad * 4 + h * 4)   # d, bias
    cost = pl.CostEstimate(flops=flops, transcendentals=0,
                           bytes_accessed=bytes_accessed)

    est_vmem = (2 * tm * tk                  # A tiles, double-buffered (int8)
                + 2 * n_pad * h * 2          # resident S (conservatively 2 buffers)
                + 2 * tm * 128 * 4           # d row tiles (lane-padded)
                + 2 * 8 * 128 * 4            # bias
                + 2 * tm * h * 4             # output tiles
                + tm * h * 4)                # f32 accumulator

    kernel = functools.partial(_gcn_agg_kernel, tk=tk)
    return pl.pallas_call(
        kernel,
        out_shape=jax.ShapeDtypeStruct((n_pad, h), out_dtype),
        grid_spec=pltpu.PrefetchScalarGridSpec(
            num_scalar_prefetch=0,
            grid=grid,
            in_specs=[
                pl.BlockSpec((tm, tk), lambda i, k: (i, k)),     # A+2I int8 tiles (streamed)
                pl.BlockSpec((n_pad, h), lambda i, k: (0, 0)),   # S = d ⊙ (V@W)  (resident)
                pl.BlockSpec((tm, 1), lambda i, k: (i, 0)),      # deg^{-1/2} row slice
                pl.BlockSpec((1, h), lambda i, k: (0, 0)),       # bias
            ],
            out_specs=pl.BlockSpec((tm, h), lambda i, k: (i, 0)),
            scratch_shapes=[pltpu.VMEM((tm, h), jnp.float32)],
        ),
        compiler_params=pltpu.CompilerParams(
            dimension_semantics=("parallel", "arbitrary"),
            vmem_limit_bytes=_vmem_limit_bytes(est_vmem),
        ),
        cost_estimate=cost,
    )(a_i8, s, d, b)


def build_graph_operands(edge_index, num_nodes, *, improved=True, pad_multiple=512):
    """Dense (A + fill*I) as int8 plus deg^{-1/2}, padded to a multiple of `pad_multiple`.

    edge_index: (2, E) int, edge_index[0]=source j, edge_index[1]=target i.
    A[i, j] = number of edges j -> i (duplicates accumulate, like scatter_add).
    NOTE: int8 storage requires (max edge multiplicity + improved fill) <= 127.
    """
    fill = 2 if improved else 1
    src, dst = edge_index[0], edge_index[1]
    counts = jnp.zeros((num_nodes, num_nodes), jnp.int32).at[dst, src].add(1)
    counts = counts + fill * jnp.eye(num_nodes, dtype=jnp.int32)
    deg = counts.sum(axis=1).astype(jnp.float32)       # incoming weights incl. self-loop
    d = jnp.where(deg > 0.0, jax.lax.rsqrt(deg), 0.0)

    n_pad = _round_up(max(num_nodes, pad_multiple), pad_multiple)
    a_pad = jnp.zeros((n_pad, n_pad), jnp.int8)
    a_pad = a_pad.at[:num_nodes, :num_nodes].set(counts.astype(jnp.int8))
    d_pad = jnp.zeros((n_pad, 1), jnp.float32).at[:num_nodes, 0].set(d)
    return a_pad, d_pad, n_pad


def gcn_forward(batch_data, params, *, improved=True):
    """Multi-layer GCN forward. Padded rows have d=0 / A=0, so they never leak."""
    v = batch_data["v"]
    edges = batch_data["edges"]
    n, hdim = v.shape

    a_i8, d, n_pad = build_graph_operands(edges, n, improved=improved)
    x = jnp.zeros((n_pad, hdim), jnp.float32).at[:n, :].set(v.astype(jnp.float32))

    for (w, b) in params:
        # Feature transform + column-side normalization: tiny O(N*H^2) XLA matmul.
        s = (d * (x @ w.astype(jnp.float32))).astype(jnp.bfloat16)
        # Row-side normalization + bias fused into the Pallas aggregation kernel.
        x = gcn_agg_pallas(a_i8, d, s, b.reshape(1, hdim).astype(jnp.float32))
    return x[:n]


def gcn_reference(v, edges, params, *, improved=True):
    """Pure-JAX f32 reference matching PyG GCNConv(improved=True)."""
    n = v.shape[0]
    fill = 2.0 if improved else 1.0
    src, dst = edges[0], edges[1]
    a = jnp.zeros((n, n), jnp.float32).at[dst, src].add(1.0)
    a = a + fill * jnp.eye(n, dtype=jnp.float32)
    deg = a.sum(axis=1)
    dis = jnp.where(deg > 0.0, jax.lax.rsqrt(deg), 0.0)
    a_hat = dis[:, None] * a * dis[None, :]
    x = v
    for (w, b) in params:
        x = a_hat @ (x @ w) + b
    return x


def init_params(key, num_layers, hidden_channels):
    params = []
    for _ in range(num_layers):
        kw, kb, key = jax.random.split(key, 3)
        scale = (2.0 / (hidden_channels + hidden_channels)) ** 0.5
        w = scale * jax.random.normal(kw, (hidden_channels, hidden_channels), jnp.float32)
        b = 0.01 * jax.random.normal(kb, (hidden_channels,), jnp.float32)
        params.append((w, b))
    return params


if __name__ == "__main__":
    NUM_LAYERS = 2
    HIDDEN = 128      # hidden_channels (module default; in=out=hidden for GCNConv)
    N_NODES = 32
    N_EDGES = 64

    key = jax.random.PRNGKey(0)
    kv, ke, kp = jax.random.split(key, 3)

    v = jax.random.normal(kv, (N_NODES, HIDDEN), jnp.float32)
    edges = jax.random.randint(ke, (2, N_EDGES), 0, N_NODES, dtype=jnp.int32)
    params = init_params(kp, NUM_LAYERS, HIDDEN)
    batch_data = {"v": v, "edges": edges}

    out = gcn_forward(batch_data, params, improved=True)
    out = jax.block_until_ready(out)

    assert out.shape == (N_NODES, HIDDEN)
    assert out.dtype == jnp.float32

    ref = gcn_reference(v, edges, params, improved=True)
    max_err = float(jnp.max(jnp.abs(out - ref)))
    assert max_err < 1e-1, f"max abs error vs reference: {max_err}"

    print("KERNEL_OK")
</pallas_src>

<mosaic_0001>
module attributes {stable_mosaic.version = 11 : i64} {
  func.func @_gcn_agg_kernel(%arg0: i32, %arg1: i32, %arg2: memref<512x512xi8, #tpu.memory_space<vmem>>, %arg3: memref<512x128xbf16, #tpu.memory_space<vmem>>, %arg4: memref<512x1xf32, #tpu.memory_space<vmem>>, %arg5: memref<1x128xf32, #tpu.memory_space<vmem>>, %arg6: memref<512x128xf32, #tpu.memory_space<vmem>>, %arg7: memref<512x128xf32, #tpu.memory_space<vmem>>) attributes {dimension_semantics = [#tpu.dimension_semantics<parallel>, #tpu.dimension_semantics<arbitrary>], iteration_bounds = array<i64: 1, 1>, scalar_prefetch = 0 : i64, scratch_operands = 1 : i64, tpu.core_type = #tpu.core_type<tc>, window_params = [{transform_indices = @transform_0, window_bounds = array<i64: 512, 512>}, {pipeline_mode = #tpu.pipeline_mode<synchronous>, transform_indices = @transform_1, window_bounds = array<i64: 512, 128>}, {transform_indices = @transform_2, window_bounds = array<i64: 512, 1>}, {pipeline_mode = #tpu.pipeline_mode<synchronous>, transform_indices = @transform_3, window_bounds = array<i64: 1, 128>}, {transform_indices = @transform_4, window_bounds = array<i64: 512, 128>}]} {
    %c0_i32 = arith.constant 0 : i32
    %0 = arith.cmpi eq, %arg1, %c0_i32 : i32
    %1 = arith.extui %0 : i1 to i32
    %c0_i32_0 = arith.constant 0 : i32
    %2 = arith.cmpi ne, %1, %c0_i32_0 : i32
    scf.if %2 {
      %cst_9 = arith.constant 0.000000e+00 : f32
      %16 = vector.broadcast %cst_9 : f32 to vector<512x128xf32>
      %c0_10 = arith.constant 0 : index
      %c0_11 = arith.constant 0 : index
      %17 = vector.load %arg7[%c0_10, %c0_11] : memref<512x128xf32, #tpu.memory_space<vmem>>, vector<512x128xf32>
      tpu.vector_store %arg7[%c0_10, %c0_11], %16 {strides = array<i32>} : memref<512x128xf32, #tpu.memory_space<vmem>>, vector<512x128xf32>,
    } else {
    }
    %c0 = arith.constant 0 : index
    %c0_1 = arith.constant 0 : index
    %3 = vector.load %arg2[%c0, %c0_1] : memref<512x512xi8, #tpu.memory_space<vmem>>, vector<512x512xi8>
    %4 = arith.sitofp %3 : vector<512x512xi8> to vector<512x512xbf16>
    %c512_i32 = arith.constant 512 : i32
    %5 = arith.muli %arg1, %c512_i32 : i32
    %6 = tpu.assume_multiple %5, 512 : i32
    %c0_2 = arith.constant 0 : index
    %c0_3 = arith.constant 0 : index
    %7 = vector.load %arg7[%c0_2, %c0_3] : memref<512x128xf32, #tpu.memory_space<vmem>>, vector<512x128xf32>
    %8 = arith.index_cast %6 : i32 to index
    %c0_4 = arith.constant 0 : index
    %9 = vector.load %arg3[%8, %c0_4] : memref<512x128xbf16, #tpu.memory_space<vmem>>, vector<512x128xbf16>
    %cst = arith.constant dense<0.000000e+00> : vector<512x128xf32>
    %10 = tpu.matmul %4, %9, %cst {dimension_numbers = #tpu.dot_dimension_numbers<[1], [0], [0], [1], [0, 0, 1, 1], [], []>} : vector<512x512xbf16>, vector<512x128xbf16>, vector<512x128xf32> -> vector<512x128xf32>
    %11 = arith.addf %7, %10 : vector<512x128xf32>
    %c0_5 = arith.constant 0 : index
    %c0_6 = arith.constant 0 : index
    %12 = vector.load %arg7[%c0_5, %c0_6] : memref<512x128xf32, #tpu.memory_space<vmem>>, vector<512x128xf32>
    tpu.vector_store %arg7[%c0_5, %c0_6], %11 {strides = array<i32>} : memref<512x128xf32, #tpu.memory_space<vmem>>, vector<512x128xf32>,
    %c0_i32_7 = arith.constant 0 : i32
    %13 = arith.cmpi eq, %arg1, %c0_i32_7 : i32
    %14 = arith.extui %13 : i1 to i32
    %c0_i32_8 = arith.constant 0 : i32
    %15 = arith.cmpi ne, %14, %c0_i32_8 : i32
    scf.if %15 {
      %c0_9 = arith.constant 0 : index
      %c0_10 = arith.constant 0 : index
      %16 = vector.load %arg4[%c0_9, %c0_10] : memref<512x1xf32, #tpu.memory_space<vmem>>, vector<512x1xf32>
      %c0_11 = arith.constant 0 : index
      %c0_12 = arith.constant 0 : index
      %17 = vector.load %arg7[%c0_11, %c0_12] : memref<512x128xf32, #tpu.memory_space<vmem>>, vector<512x128xf32>
      %18 = vector.broadcast %16 : vector<512x1xf32> to vector<512x128xf32>
      %19 = arith.mulf %18, %17 : vector<512x128xf32>
      %c0_13 = arith.constant 0 : index
      %c0_14 = arith.constant 0 : index
      %20 = vector.load %arg5[%c0_13, %c0_14] : memref<1x128xf32, #tpu.memory_space<vmem>>, vector<1x128xf32>
      %21 = vector.broadcast %20 : vector<1x128xf32> to vector<512x128xf32>
      %22 = arith.addf %19, %21 : vector<512x128xf32>
      %c0_15 = arith.constant 0 : index
      %c0_16 = arith.constant 0 : index
      %23 = vector.load %arg6[%c0_15, %c0_16] : memref<512x128xf32, #tpu.memory_space<vmem>>, vector<512x128xf32>
      tpu.vector_store %arg6[%c0_15, %c0_16], %22 {strides = array<i32>} : memref<512x128xf32, #tpu.memory_space<vmem>>, vector<512x128xf32>,
    } else {
    }
    return
  }
  func.func @transform_0(%arg0: i32, %arg1: i32) -> (i32, i32) {
    %c0_i32 = arith.constant 0 : i32
    return %arg0, %arg1 : i32, i32
  }
  func.func @transform_1(%arg0: i32, %arg1: i32) -> (i32, i32) {
    %c0_i32 = arith.constant 0 : i32
    %c0_i32_0 = arith.constant 0 : i32
    %c0_i32_1 = arith.constant 0 : i32
    return %c0_i32, %c0_i32_0 : i32, i32
  }
  func.func @transform_2(%arg0: i32, %arg1: i32) -> (i32, i32) {
    %c0_i32 = arith.constant 0 : i32
    %c0_i32_0 = arith.constant 0 : i32
    return %arg0, %c0_i32 : i32, i32
  }
  func.func @transform_3(%arg0: i32, %arg1: i32) -> (i32, i32) {
    %c0_i32 = arith.constant 0 : i32
    %c0_i32_0 = arith.constant 0 : i32
    %c0_i32_1 = arith.constant 0 : i32
    return %c0_i32, %c0_i32_0 : i32, i32
  }
  func.func @transform_4(%arg0: i32, %arg1: i32) -> (i32, i32) {
    %c0_i32 = arith.constant 0 : i32
    %c0_i32_0 = arith.constant 0 : i32
    return %arg0, %c0_i32 : i32, i32
  }
}

</mosaic_0001>

<llo_original>
// kernel: tpu_custom_call.1
$region0: #{tpu_custom_call.1}
  #allocation0 [shape = 'u32[]', space=smem, size = 0x4, offset = 0x4, fixed_abs, tag = 'smem constant byte address 0x4 - core index']
  #allocation1 [shape = 'u32[144,128]{1,0:T(1,128)}', space=vmem, size = 0x12000, scoped, tag = 'internal scratch']
  #allocation2 [shape = 'f32[512,128]{1,0:T(8,128)}', space=vmem, size = 0x40000, scoped, tag = 'scratch operand']
  %s0 = inlined_call_operand.vmem [shape: s8[512,512], index: 0, kind: input, shape index: {}]
  %s1 = inlined_call_operand.hbm [shape: bf16[512,128], index: 1, kind: input, shape index: {}]
  %s2 = inlined_call_operand.vmem [shape: f32[512,1], index: 2, kind: input, shape index: {}]
  %s3 = inlined_call_operand.vmem [shape: f32[1,128], index: 3, kind: input, shape index: {}]
  %s4 = inlined_call_operand.hbm [shape: f32[512,128], index: 4, kind: output, shape index: {}]
  %s5 = sld [smem:[#allocation0]]
  $region38: #{tpu_custom_call.1} parent=0
    _
  %s7 = ssub.s32 1, %s5
  %s8 = scalar_select 0, %s7, %s5
  $region1: #{tpu_custom_call.1} parent=0
    #allocation3 [shape = 'u8[131072]{0}', space=vmem, size = 0x20000, scoped, tag = 'input window, operand 1, single buffered']
    #allocation4 [shape = 's32[1]{0}', space=sflag, size = 0x4, scoped, tag = 'scoped memory for tpu_custom_call.1']
    #allocation5 [shape = 's32[1]{0}', space=sflag, size = 0x4, scoped, tag = 'scoped memory for tpu_custom_call.1']
    #allocation6 [shape = 'u8[262144]{0}', space=vmem, size = 0x40000, scoped, tag = 'output window, operand 0, single buffered']
    %9 = vsyncpa [#allocation4], 0
    %10 = vsyncpa [#allocation5], 0
    // Predicated region
    $region2: #{tpu_custom_call.1} parent=1 // pred_check
      _
    $region3: #{tpu_custom_call.1} parent=1 // pred_check_branch
      %12 = sbr.rel (0) target = $region5
    $region4: #{tpu_custom_call.1} parent=1 // pred_region
      _
    $region5: #{tpu_custom_call.1} parent=1 // pred_fallthru
      _
    // Predicated region
    $region6: #{tpu_custom_call.1} parent=1 // pred_check
      _
    $region7: #{tpu_custom_call.1} parent=1 // pred_check_branch
      %14 = sbr.rel (0) target = $region9
    $region8: #{tpu_custom_call.1} parent=1 // pred_region
      %s16 = ssub.s32 4096, 4096
      %17 = vsyncadd [#allocation4], %s16
      %s18 = sshll.u32 [#allocation3], 4
      %s19 = int_to_ptr.vmem [resolvable:$true] %s18
      %24 = dma.hbm_to_vmem [thread:$0]  %s1, 4096, %s19, [#allocation4], 64, 64, 4
    $region9: #{tpu_custom_call.1} parent=1 // pred_fallthru
      _
    // Predicated region
    $region10: #{tpu_custom_call.1} parent=1 // pred_check
      _
    $region11: #{tpu_custom_call.1} parent=1 // pred_check_branch
      %26 = sbr.rel (0) target = $region13
    $region12: #{tpu_custom_call.1} parent=1 // pred_region
      _
    $region13: #{tpu_custom_call.1} parent=1 // pred_fallthru
      _
    // Predicated region
    $region14: #{tpu_custom_call.1} parent=1 // pred_check
      _
    $region15: #{tpu_custom_call.1} parent=1 // pred_check_branch
      %28 = sbr.rel (0) target = $region17
    $region16: #{tpu_custom_call.1} parent=1 // pred_region
      _
    $region17: #{tpu_custom_call.1} parent=1 // pred_fallthru
      _
    // Predicated region
    $region18: #{tpu_custom_call.1} parent=1 // pred_check
      _
    $region19: #{tpu_custom_call.1} parent=1 // pred_check_branch
      %30 = sbr.rel (0) target = $region21
    $region20: #{tpu_custom_call.1} parent=1 // pred_region
      %31 = dma.done [#allocation4], 4096
    $region21: #{tpu_custom_call.1} parent=1 // pred_fallthru
      _
    %p33 = scmp.eq.s32.totalorder 0, 0
    // Predicated region
    $region22: #{tpu_custom_call.1} parent=1 // pred_check
      %p34 = pneg %p33
    $region23: #{tpu_custom_call.1} parent=1 // pred_check_branch
      %36 = sbr.rel (%p34) target = $region25
    $region24: #{tpu_custom_call.1} parent=1 // pred_region
      %37 = vst [vmem:[#allocation2] sm:$0xff] 0.0
      %38 = vst [vmem:[#allocation2 + $0x8] sm:$0xff] 0.0
      %39 = vst [vmem:[#allocation2 + $0x10] sm:$0xff] 0.0
      %40 = vst [vmem:[#allocation2 + $0x18] sm:$0xff] 0.0
      %41 = vst [vmem:[#allocation2 + $0x20] sm:$0xff] 0.0
      %42 = vst [vmem:[#allocation2 + $0x28] sm:$0xff] 0.0
      %43 = vst [vmem:[#allocation2 + $0x30] sm:$0xff] 0.0
      %44 = vst [vmem:[#allocation2 + $0x38] sm:$0xff] 0.0
      %45 = vst [vmem:[#allocation2 + $0x40] sm:$0xff] 0.0
      %46 = vst [vmem:[#allocation2 + $0x48] sm:$0xff] 0.0
      %47 = vst [vmem:[#allocation2 + $0x50] sm:$0xff] 0.0
      %48 = vst [vmem:[#allocation2 + $0x58] sm:$0xff] 0.0
      %49 = vst [vmem:[#allocation2 + $0x60] sm:$0xff] 0.0
      %50 = vst [vmem:[#allocation2 + $0x68] sm:$0xff] 0.0
      %51 = vst [vmem:[#allocation2 + $0x70] sm:$0xff] 0.0
      %52 = vst [vmem:[#allocation2 + $0x78] sm:$0xff] 0.0
      %53 = vst [vmem:[#allocation2 + $0x80] sm:$0xff] 0.0
      %54 = vst [vmem:[#allocation2 + $0x88] sm:$0xff] 0.0
      %55 = vst [vmem:[#allocation2 + $0x90] sm:$0xff] 0.0
      %56 = vst [vmem:[#allocation2 + $0x98] sm:$0xff] 0.0
      %57 = vst [vmem:[#allocation2 + $0xa0] sm:$0xff] 0.0
      %58 = vst [vmem:[#allocation2 + $0xa8] sm:$0xff] 0.0
      %59 = vst [vmem:[#allocation2 + $0xb0] sm:$0xff] 0.0
      %60 = vst [vmem:[#allocation2 + $0xb8] sm:$0xff] 0.0
      %61 = vst [vmem:[#allocation2 + $0xc0] sm:$0xff] 0.0
      %62 = vst [vmem:[#allocation2 + $0xc8] sm:$0xff] 0.0
      %63 = vst [vmem:[#allocation2 + $0xd0] sm:$0xff] 0.0
      %64 = vst [vmem:[#allocation2 + $0xd8] sm:$0xff] 0.0
      %65 = vst [vmem:[#allocation2 + $0xe0] sm:$0xff] 0.0
      %66 = vst [vmem:[#allocation2 + $0xe8] sm:$0xff] 0.0
      %67 = vst [vmem:[#allocation2 + $0xf0] sm:$0xff] 0.0
      %68 = vst [vmem:[#allocation2 + $0xf8] sm:$0xff] 0.0
      %69 = vst [vmem:[#allocation2 + $0x100] sm:$0xff] 0.0
      %70 = vst [vmem:[#allocation2 + $0x108] sm:$0xff] 0.0
      %71 = vst [vmem:[#allocation2 + $0x110] sm:$0xff] 0.0
      %72 = vst [vmem:[#allocation2 + $0x118] sm:$0xff] 0.0
      %73 = vst [vmem:[#allocation2 + $0x120] sm:$0xff] 0.0
      %74 = vst [vmem:[#allocation2 + $0x128] sm:$0xff] 0.0
      %75 = vst [vmem:[#allocation2 + $0x130] sm:$0xff] 0.0
      %76 = vst [vmem:[#allocation2 + $0x138] sm:$0xff] 0.0
      %77 = vst [vmem:[#allocation2 + $0x140] sm:$0xff] 0.0
      %78 = vst [vmem:[#allocation2 + $0x148] sm:$0xff] 0.0
      %79 = vst [vmem:[#allocation2 + $0x150] sm:$0xff] 0.0
      %80 = vst [vmem:[#allocation2 + $0x158] sm:$0xff] 0.0
      %81 = vst [vmem:[#allocation2 + $0x160] sm:$0xff] 0.0
      %82 = vst [vmem:[#allocation2 + $0x168] sm:$0xff] 0.0
      %83 = vst [vmem:[#allocation2 + $0x170] sm:$0xff] 0.0
      %84 = vst [vmem:[#allocation2 + $0x178] sm:$0xff] 0.0
      %85 = vst [vmem:[#allocation2 + $0x180] sm:$0xff] 0.0
      %86 = vst [vmem:[#allocation2 + $0x188] sm:$0xff] 0.0
      %87 = vst [vmem:[#allocation2 + $0x190] sm:$0xff] 0.0
      %88 = vst [vmem:[#allocation2 + $0x198] sm:$0xff] 0.0
      %89 = vst [vmem:[#allocation2 + $0x1a0] sm:$0xff] 0.0
      %90 = vst [vmem:[#allocation2 + $0x1a8] sm:$0xff] 0.0
      %91 = vst [vmem:[#allocation2 + $0x1b0] sm:$0xff] 0.0
      %92 = vst [vmem:[#allocation2 + $0x1b8] sm:$0xff] 0.0
      %93 = vst [vmem:[#allocation2 + $0x1c0] sm:$0xff] 0.0
      %94 = vst [vmem:[#allocation2 + $0x1c8] sm:$0xff] 0.0
      %95 = vst [vmem:[#allocation2 + $0x1d0] sm:$0xff] 0.0
      %96 = vst [vmem:[#allocation2 + $0x1d8] sm:$0xff] 0.0
      %97 = vst [vmem:[#allocation2 + $0x1e0] sm:$0xff] 0.0
      %98 = vst [vmem:[#allocation2 + $0x1e8] sm:$0xff] 0.0
      %99 = vst [vmem:[#allocation2 + $0x1f0] sm:$0xff] 0.0
      %100 = vst [vmem:[#allocation2 + $0x1f8] sm:$0xff] 0.0
    $region25: #{tpu_custom_call.1} parent=1 // pred_fallthru
      _
    %v101 = vld [vmem:[%s0] sm:$0xff]
    %v102 = vld [vmem:[%s0 + $0x8] sm:$0xff]
    %v103 = vld [vmem:[%s0 + $0x10] sm:$0xff]
    %v104 = vld [vmem:[%s0 + $0x18] sm:$0xff]
    %v105 = vld [vmem:[%s0 + $0x20] sm:$0xff]
    %v106 = vld [vmem:[%s0 + $0x28] sm:$0xff]
    %v107 = vld [vmem:[%s0 + $0x30] sm:$0xff]
    %v108 = vld [vmem:[%s0 + $0x38] sm:$0xff]
    %v109 = vld [vmem:[%s0 + $0x40] sm:$0xff]
    %v110 = vld [vmem:[%s0 + $0x48] sm:$0xff]
    %v111 = vld [vmem:[%s0 + $0x50] sm:$0xff]
    %v112 = vld [vmem:[%s0 + $0x58] sm:$0xff]
    %v113 = vld [vmem:[%s0 + $0x60] sm:$0xff]
    %v114 = vld [vmem:[%s0 + $0x68] sm:$0xff]
    %v115 = vld [vmem:[%s0 + $0x70] sm:$0xff]
    %v116 = vld [vmem:[%s0 + $0x78] sm:$0xff]
    %v117 = vld [vmem:[%s0 + $0x80] sm:$0xff]
    %v118 = vld [vmem:[%s0 + $0x88] sm:$0xff]
    %v119 = vld [vmem:[%s0 + $0x90] sm:$0xff]
    %v120 = vld [vmem:[%s0 + $0x98] sm:$0xff]
    %v121 = vld [vmem:[%s0 + $0xa0] sm:$0xff]
    %v122 = vld [vmem:[%s0 + $0xa8] sm:$0xff]
    %v123 = vld [vmem:[%s0 + $0xb0] sm:$0xff]
    %v124 = vld [vmem:[%s0 + $0xb8] sm:$0xff]
    %v125 = vld [vmem:[%s0 + $0xc0] sm:$0xff]
    %v126 = vld [vmem:[%s0 + $0xc8] sm:$0xff]
    %v127 = vld [vmem:[%s0 + $0xd0] sm:$0xff]
    %v128 = vld [vmem:[%s0 + $0xd8] sm:$0xff]
    %v129 = vld [vmem:[%s0 + $0xe0] sm:$0xff]
    %v130 = vld [vmem:[%s0 + $0xe8] sm:$0xff]
    %v131 = vld [vmem:[%s0 + $0xf0] sm:$0xff]
    %v132 = vld [vmem:[%s0 + $0xf8] sm:$0xff]
    %v133 = vld [vmem:[%s0 + $0x100] sm:$0xff]
    %v134 = vld [vmem:[%s0 + $0x108] sm:$0xff]
    %v135 = vld [vmem:[%s0 + $0x110] sm:$0xff]
    %v136 = vld [vmem:[%s0 + $0x118] sm:$0xff]
    %v137 = vld [vmem:[%s0 + $0x120] sm:$0xff]
    %v138 = vld [vmem:[%s0 + $0x128] sm:$0xff]
    %v139 = vld [vmem:[%s0 + $0x130] sm:$0xff]
    %v140 = vld [vmem:[%s0 + $0x138] sm:$0xff]
    %v141 = vld [vmem:[%s0 + $0x140] sm:$0xff]
    %v142 = vld [vmem:[%s0 + $0x148] sm:$0xff]
    %v143 = vld [vmem:[%s0 + $0x150] sm:$0xff]
    %v144 = vld [vmem:[%s0 + $0x158] sm:$0xff]
    %v145 = vld [vmem:[%s0 + $0x160] sm:$0xff]
    %v146 = vld [vmem:[%s0 + $0x168] sm:$0xff]
    %v147 = vld [vmem:[%s0 + $0x170] sm:$0xff]
    %v148 = vld [vmem:[%s0 + $0x178] sm:$0xff]
    %v149 = vld [vmem:[%s0 + $0x180] sm:$0xff]
    %v150 = vld [vmem:[%s0 + $0x188] sm:$0xff]
    %v151 = vld [vmem:[%s0 + $0x190] sm:$0xff]
    %v152 = vld [vmem:[%s0 + $0x198] sm:$0xff]
    %v153 = vld [vmem:[%s0 + $0x1a0] sm:$0xff]
    %v154 = vld [vmem:[%s0 + $0x1a8] sm:$0xff]
    %v155 = vld [vmem:[%s0 + $0x1b0] sm:$0xff]
    %v156 = vld [vmem:[%s0 + $0x1b8] sm:$0xff]
    %v157 = vld [vmem:[%s0 + $0x1c0] sm:$0xff]
    %v158 = vld [vmem:[%s0 + $0x1c8] sm:$0xff]
    %v159 = vld [vmem:[%s0 + $0x1d0] sm:$0xff]
    %v160 = vld [vmem:[%s0 + $0x1d8] sm:$0xff]
    %v161 = vld [vmem:[%s0 + $0x1e0] sm:$0xff]
    %v162 = vld [vmem:[%s0 + $0x1e8] sm:$0xff]
    %v163 = vld [vmem:[%s0 + $0x1f0] sm:$0xff]
    %v164 = vld [vmem:[%s0 + $0x1f8] sm:$0xff]
    %v165 = vunpack.c.l.s8.bf16 %v101
    %v166 = vunpack.c.l.s8.bf16 %v102
    %v167 = vunpack.c.l.s8.bf16 %v103
    %v168 = vunpack.c.l.s8.bf16 %v104
    %v169 = vunpack.c.h.s8.bf16 %v101
    %v170 = vunpack.c.h.s8.bf16 %v102
    %v171 = vunpack.c.h.s8.bf16 %v103
    %v172 = vunpack.c.h.s8.bf16 %v104
    %v173 = vunpack.c.l.s8.bf16 %v105
    %v174 = vunpack.c.l.s8.bf16 %v106
    %v175 = vunpack.c.l.s8.bf16 %v107
    %v176 = vunpack.c.l.s8.bf16 %v108
    %v177 = vunpack.c.h.s8.bf16 %v105
    %v178 = vunpack.c.h.s8.bf16 %v106
    %v179 = vunpack.c.h.s8.bf16 %v107
    %v180 = vunpack.c.h.s8.bf16 %v108
    %v181 = vunpack.c.l.s8.bf16 %v109
    %v182 = vunpack.c.l.s8.bf16 %v110
    %v183 = vunpack.c.l.s8.bf16 %v111
    %v184 = vunpack.c.l.s8.bf16 %v112
    %v185 = vunpack.c.h.s8.bf16 %v109
    %v186 = vunpack.c.h.s8.bf16 %v110
    %v187 = vunpack.c.h.s8.bf16 %v111
    %v188 = vunpack.c.h.s8.bf16 %v112
    %v189 = vunpack.c.l.s8.bf16 %v113
    %v190 = vunpack.c.l.s8.bf16 %v114
    %v191 = vunpack.c.l.s8.bf16 %v115
    %v192 = vunpack.c.l.s8.bf16 %v116
    %v193 = vunpack.c.h.s8.bf16 %v113
    %v194 = vunpack.c.h.s8.bf16 %v114
    %v195 = vunpack.c.h.s8.bf16 %v115
    %v196 = vunpack.c.h.s8.bf16 %v116
    %v197 = vunpack.c.l.s8.bf16 %v117
    %v198 = vunpack.c.l.s8.bf16 %v118
    %v199 = vunpack.c.l.s8.bf16 %v119
    %v200 = vunpack.c.l.s8.bf16 %v120
    %v201 = vunpack.c.h.s8.bf16 %v117
    %v202 = vunpack.c.h.s8.bf16 %v118
    %v203 = vunpack.c.h.s8.bf16 %v119
    %v204 = vunpack.c.h.s8.bf16 %v120
    %v205 = vunpack.c.l.s8.bf16 %v121
    %v206 = vunpack.c.l.s8.bf16 %v122
    %v207 = vunpack.c.l.s8.bf16 %v123
    %v208 = vunpack.c.l.s8.bf16 %v124
    %v209 = vunpack.c.h.s8.bf16 %v121
    %v210 = vunpack.c.h.s8.bf16 %v122
    %v211 = vunpack.c.h.s8.bf16 %v123
    %v212 = vunpack.c.h.s8.bf16 %v124
    %v213 = vunpack.c.l.s8.bf16 %v125
    %v214 = vunpack.c.l.s8.bf16 %v126
    %v215 = vunpack.c.l.s8.bf16 %v127
    %v216 = vunpack.c.l.s8.bf16 %v128
    %v217 = vunpack.c.h.s8.bf16 %v125
    %v218 = vunpack.c.h.s8.bf16 %v126
    %v219 = vunpack.c.h.s8.bf16 %v127
    %v220 = vunpack.c.h.s8.bf16 %v128
    %v221 = vunpack.c.l.s8.bf16 %v129
    %v222 = vunpack.c.l.s8.bf16 %v130
    %v223 = vunpack.c.l.s8.bf16 %v131
    %v224 = vunpack.c.l.s8.bf16 %v132
    %v225 = vunpack.c.h.s8.bf16 %v129
    %v226 = vunpack.c.h.s8.bf16 %v130
    %v227 = vunpack.c.h.s8.bf16 %v131
    %v228 = vunpack.c.h.s8.bf16 %v132
    %v229 = vunpack.c.l.s8.bf16 %v133
    %v230 = vunpack.c.l.s8.bf16 %v134
    %v231 = vunpack.c.l.s8.bf16 %v135
    %v232 = vunpack.c.l.s8.bf16 %v136
    %v233 = vunpack.c.h.s8.bf16 %v133
    %v234 = vunpack.c.h.s8.bf16 %v134
    %v235 = vunpack.c.h.s8.bf16 %v135
    %v236 = vunpack.c.h.s8.bf16 %v136
    %v237 = vunpack.c.l.s8.bf16 %v137
    %v238 = vunpack.c.l.s8.bf16 %v138
    %v239 = vunpack.c.l.s8.bf16 %v139
    %v240 = vunpack.c.l.s8.bf16 %v140
    %v241 = vunpack.c.h.s8.bf16 %v137
    %v242 = vunpack.c.h.s8.bf16 %v138
    %v243 = vunpack.c.h.s8.bf16 %v139
    %v244 = vunpack.c.h.s8.bf16 %v140
    %v245 = vunpack.c.l.s8.bf16 %v141
    %v246 = vunpack.c.l.s8.bf16 %v142
    %v247 = vunpack.c.l.s8.bf16 %v143
    %v248 = vunpack.c.l.s8.bf16 %v144
    %v249 = vunpack.c.h.s8.bf16 %v141
    %v250 = vunpack.c.h.s8.bf16 %v142
    %v251 = vunpack.c.h.s8.bf16 %v143
    %v252 = vunpack.c.h.s8.bf16 %v144
    %v253 = vunpack.c.l.s8.bf16 %v145
    %v254 = vunpack.c.l.s8.bf16 %v146
    %v255 = vunpack.c.l.s8.bf16 %v147
    %v256 = vunpack.c.l.s8.bf16 %v148
    %v257 = vunpack.c.h.s8.bf16 %v145
    %v258 = vunpack.c.h.s8.bf16 %v146
    %v259 = vunpack.c.h.s8.bf16 %v147
    %v260 = vunpack.c.h.s8.bf16 %v148
    %v261 = vunpack.c.l.s8.bf16 %v149
    %v262 = vunpack.c.l.s8.bf16 %v150
    %v263 = vunpack.c.l.s8.bf16 %v151
    %v264 = vunpack.c.l.s8.bf16 %v152
    %v265 = vunpack.c.h.s8.bf16 %v149
    %v266 = vunpack.c.h.s8.bf16 %v150
    %v267 = vunpack.c.h.s8.bf16 %v151
    %v268 = vunpack.c.h.s8.bf16 %v152
    %v269 = vunpack.c.l.s8.bf16 %v153
    %v270 = vunpack.c.l.s8.bf16 %v154
    %v271 = vunpack.c.l.s8.bf16 %v155
    %v272 = vunpack.c.l.s8.bf16 %v156
    %v273 = vunpack.c.h.s8.bf16 %v153
    %v274 = vunpack.c.h.s8.bf16 %v154
    %v275 = vunpack.c.h.s8.bf16 %v155
    %v276 = vunpack.c.h.s8.bf16 %v156
    %v277 = vunpack.c.l.s8.bf16 %v157
    %v278 = vunpack.c.l.s8.bf16 %v158
    %v279 = vunpack.c.l.s8.bf16 %v159
    %v280 = vunpack.c.l.s8.bf16 %v160
    %v281 = vunpack.c.h.s8.bf16 %v157
    %v282 = vunpack.c.h.s8.bf16 %v158
    %v283 = vunpack.c.h.s8.bf16 %v159
    %v284 = vunpack.c.h.s8.bf16 %v160
    %v285 = vunpack.c.l.s8.bf16 %v161
    %v286 = vunpack.c.l.s8.bf16 %v162
    %v287 = vunpack.c.l.s8.bf16 %v163
    %v288 = vunpack.c.l.s8.bf16 %v164
    %v289 = vunpack.c.h.s8.bf16 %v161
    %v290 = vunpack.c.h.s8.bf16 %v162
    %v291 = vunpack.c.h.s8.bf16 %v163
    %v292 = vunpack.c.h.s8.bf16 %v164
    %s293 = smul.u32 0, 512
    %v294 = vld [vmem:[#allocation2] sm:$0xff]
    %v295 = vld [vmem:[#allocation2 + $0x8] sm:$0xff]
    %v296 = vld [vmem:[#allocation2 + $0x10] sm:$0xff]
    %v297 = vld [vmem:[#allocation2 + $0x18] sm:$0xff]
    %v298 = vld [vmem:[#allocation2 + $0x20] sm:$0xff]
    %v299 = vld [vmem:[#allocation2 + $0x28] sm:$0xff]
    %v300 = vld [vmem:[#allocation2 + $0x30] sm:$0xff]
    %v301 = vld [vmem:[#allocation2 + $0x38] sm:$0xff]
    %v302 = vld [vmem:[#allocation2 + $0x40] sm:$0xff]
    %v303 = vld [vmem:[#allocation2 + $0x48] sm:$0xff]
    %v304 = vld [vmem:[#allocation2 + $0x50] sm:$0xff]
    %v305 = vld [vmem:[#allocation2 + $0x58] sm:$0xff]
    %v306 = vld [vmem:[#allocation2 + $0x60] sm:$0xff]
    %v307 = vld [vmem:[#allocation2 + $0x68] sm:$0xff]
    %v308 = vld [vmem:[#allocation2 + $0x70] sm:$0xff]
    %v309 = vld [vmem:[#allocation2 + $0x78] sm:$0xff]
    %v310 = vld [vmem:[#allocation2 + $0x80] sm:$0xff]
    %v311 = vld [vmem:[#allocation2 + $0x88] sm:$0xff]
    %v312 = vld [vmem:[#allocation2 + $0x90] sm:$0xff]
    %v313 = vld [vmem:[#allocation2 + $0x98] sm:$0xff]
    %v314 = vld [vmem:[#allocation2 + $0xa0] sm:$0xff]
    %v315 = vld [vmem:[#allocation2 + $0xa8] sm:$0xff]
    %v316 = vld [vmem:[#allocation2 + $0xb0] sm:$0xff]
    %v317 = vld [vmem:[#allocation2 + $0xb8] sm:$0xff]
    %v318 = vld [vmem:[#allocation2 + $0xc0] sm:$0xff]
    %v319 = vld [vmem:[#allocation2 + $0xc8] sm:$0xff]
    %v320 = vld [vmem:[#allocation2 + $0xd0] sm:$0xff]
    %v321 = vld [vmem:[#allocation2 + $0xd8] sm:$0xff]
    %v322 = vld [vmem:[#allocation2 + $0xe0] sm:$0xff]
    %v323 = vld [vmem:[#allocation2 + $0xe8] sm:$0xff]
    %v324 = vld [vmem:[#allocation2 + $0xf0] sm:$0xff]
    %v325 = vld [vmem:[#allocation2 + $0xf8] sm:$0xff]
    %v326 = vld [vmem:[#allocation2 + $0x100] sm:$0xff]
    %v327 = vld [vmem:[#allocation2 + $0x108] sm:$0xff]
    %v328 = vld [vmem:[#allocation2 + $0x110] sm:$0xff]
    %v329 = vld [vmem:[#allocation2 + $0x118] sm:$0xff]
    %v330 = vld [vmem:[#allocation2 + $0x120] sm:$0xff]
    %v331 = vld [vmem:[#allocation2 + $0x128] sm:$0xff]
    %v332 = vld [vmem:[#allocation2 + $0x130] sm:$0xff]
    %v333 = vld [vmem:[#allocation2 + $0x138] sm:$0xff]
    %v334 = vld [vmem:[#allocation2 + $0x140] sm:$0xff]
    %v335 = vld [vmem:[#allocation2 + $0x148] sm:$0xff]
    %v336 = vld [vmem:[#allocation2 + $0x150] sm:$0xff]
    %v337 = vld [vmem:[#allocation2 + $0x158] sm:$0xff]
    %v338 = vld [vmem:[#allocation2 + $0x160] sm:$0xff]
    %v339 = vld [vmem:[#allocation2 + $0x168] sm:$0xff]
    %v340 = vld [vmem:[#allocation2 + $0x170] sm:$0xff]
    %v341 = vld [vmem:[#allocation2 + $0x178] sm:$0xff]
    %v342 = vld [vmem:[#allocation2 + $0x180] sm:$0xff]
    %v343 = vld [vmem:[#allocation2 + $0x188] sm:$0xff]
    %v344 = vld [vmem:[#allocation2 + $0x190] sm:$0xff]
    %v345 = vld [vmem:[#allocation2 + $0x198] sm:$0xff]
    %v346 = vld [vmem:[#allocation2 + $0x1a0] sm:$0xff]
    %v347 = vld [vmem:[#allocation2 + $0x1a8] sm:$0xff]
    %v348 = vld [vmem:[#allocation2 + $0x1b0] sm:$0xff]
    %v349 = vld [vmem:[#allocation2 + $0x1b8] sm:$0xff]
    %v350 = vld [vmem:[#allocation2 + $0x1c0] sm:$0xff]
    %v351 = vld [vmem:[#allocation2 + $0x1c8] sm:$0xff]
    %v352 = vld [vmem:[#allocation2 + $0x1d0] sm:$0xff]
    %v353 = vld [vmem:[#allocation2 + $0x1d8] sm:$0xff]
    %v354 = vld [vmem:[#allocation2 + $0x1e0] sm:$0xff]
    %v355 = vld [vmem:[#allocation2 + $0x1e8] sm:$0xff]
    %v356 = vld [vmem:[#allocation2 + $0x1f0] sm:$0xff]
    %v357 = vld [vmem:[#allocation2 + $0x1f8] sm:$0xff]
    %s358 = sshra.s32 %s293, 3
    %s359 = sand.u32 %s293, 7
    %s360 = smul.addr %s358, 4
    %s361 = scalar_lea.vmem [#allocation3], %s360
    %v362 = vld [vmem:[%s361] sm:$0xf]
    %v363 = vld [vmem:[%s361 + $0x4] sm:$0xf]
    %v364 = vld [vmem:[%s361 + $0x8] sm:$0xf]
    %v365 = vld [vmem:[%s361 + $0xc] sm:$0xf]
    %v366 = vld [vmem:[%s361 + $0x10] sm:$0xf]
    %v367 = vld [vmem:[%s361 + $0x14] sm:$0xf]
    %v368 = vld [vmem:[%s361 + $0x18] sm:$0xf]
    %v369 = vld [vmem:[%s361 + $0x1c] sm:$0xf]
    %v370 = vld [vmem:[%s361 + $0x20] sm:$0xf]
    %v371 = vld [vmem:[%s361 + $0x24] sm:$0xf]
    %v372 = vld [vmem:[%s361 + $0x28] sm:$0xf]
    %v373 = vld [vmem:[%s361 + $0x2c] sm:$0xf]
    %v374 = vld [vmem:[%s361 + $0x30] sm:$0xf]
    %v375 = vld [vmem:[%s361 + $0x34] sm:$0xf]
    %v376 = vld [vmem:[%s361 + $0x38] sm:$0xf]
    %v377 = vld [vmem:[%s361 + $0x3c] sm:$0xf]
    %v378 = vld [vmem:[%s361 + $0x40] sm:$0xf]
    %v379 = vld [vmem:[%s361 + $0x44] sm:$0xf]
    %v380 = vld [vmem:[%s361 + $0x48] sm:$0xf]
    %v381 = vld [vmem:[%s361 + $0x4c] sm:$0xf]
    %v382 = vld [vmem:[%s361 + $0x50] sm:$0xf]
    %v383 = vld [vmem:[%s361 + $0x54] sm:$0xf]
    %v384 = vld [vmem:[%s361 + $0x58] sm:$0xf]
    %v385 = vld [vmem:[%s361 + $0x5c] sm:$0xf]
    %v386 = vld [vmem:[%s361 + $0x60] sm:$0xf]
    %v387 = vld [vmem:[%s361 + $0x64] sm:$0xf]
    %v388 = vld [vmem:[%s361 + $0x68] sm:$0xf]
    %v389 = vld [vmem:[%s361 + $0x6c] sm:$0xf]
    %v390 = vld [vmem:[%s361 + $0x70] sm:$0xf]
    %v391 = vld [vmem:[%s361 + $0x74] sm:$0xf]
    %v392 = vld [vmem:[%s361 + $0x78] sm:$0xf]
    %v393 = vld [vmem:[%s361 + $0x7c] sm:$0xf]
    %v394 = vld [vmem:[%s361 + $0x80] sm:$0xf]
    %v395 = vld [vmem:[%s361 + $0x84] sm:$0xf]
    %v396 = vld [vmem:[%s361 + $0x88] sm:$0xf]
    %v397 = vld [vmem:[%s361 + $0x8c] sm:$0xf]
    %v398 = vld [vmem:[%s361 + $0x90] sm:$0xf]
    %v399 = vld [vmem:[%s361 + $0x94] sm:$0xf]
    %v400 = vld [vmem:[%s361 + $0x98] sm:$0xf]
    %v401 = vld [vmem:[%s361 + $0x9c] sm:$0xf]
    %v402 = vld [vmem:[%s361 + $0xa0] sm:$0xf]
    %v403 = vld [vmem:[%s361 + $0xa4] sm:$0xf]
    %v404 = vld [vmem:[%s361 + $0xa8] sm:$0xf]
    %v405 = vld [vmem:[%s361 + $0xac] sm:$0xf]
    %v406 = vld [vmem:[%s361 + $0xb0] sm:$0xf]
    %v407 = vld [vmem:[%s361 + $0xb4] sm:$0xf]
    %v408 = vld [vmem:[%s361 + $0xb8] sm:$0xf]
    %v409 = vld [vmem:[%s361 + $0xbc] sm:$0xf]
    %v410 = vld [vmem:[%s361 + $0xc0] sm:$0xf]
    %v411 = vld [vmem:[%s361 + $0xc4] sm:$0xf]
    %v412 = vld [vmem:[%s361 + $0xc8] sm:$0xf]
    %v413 = vld [vmem:[%s361 + $0xcc] sm:$0xf]
    %v414 = vld [vmem:[%s361 + $0xd0] sm:$0xf]
    %v415 = vld [vmem:[%s361 + $0xd4] sm:$0xf]
    %v416 = vld [vmem:[%s361 + $0xd8] sm:$0xf]
    %v417 = vld [vmem:[%s361 + $0xdc] sm:$0xf]
    %v418 = vld [vmem:[%s361 + $0xe0] sm:$0xf]
    %v419 = vld [vmem:[%s361 + $0xe4] sm:$0xf]
    %v420 = vld [vmem:[%s361 + $0xe8] sm:$0xf]
    %v421 = vld [vmem:[%s361 + $0xec] sm:$0xf]
    %v422 = vld [vmem:[%s361 + $0xf0] sm:$0xf]
    %v423 = vld [vmem:[%s361 + $0xf4] sm:$0xf]
    %v424 = vld [vmem:[%s361 + $0xf8] sm:$0xf]
    %v425 = vld [vmem:[%s361 + $0xfc] sm:$0xf]
    %v490 = vunpack.c.l.b16 %v362
    %v491 = vunpack.c.l.b16 %v363
    %v492 = vunpack.c.l.b16 %v364
    %v493 = vunpack.c.l.b16 %v365
    %v494 = vunpack.c.l.b16 %v366
    %v495 = vunpack.c.l.b16 %v367
    %v496 = vunpack.c.l.b16 %v368
    %v497 = vunpack.c.l.b16 %v369
    %v498 = vunpack.c.l.b16 %v370
    %v499 = vunpack.c.l.b16 %v371
    %v500 = vunpack.c.l.b16 %v372
    %v501 = vunpack.c.l.b16 %v373
    %v502 = vunpack.c.l.b16 %v374
    %v503 = vunpack.c.l.b16 %v375
    %v504 = vunpack.c.l.b16 %v376
    %v505 = vunpack.c.l.b16 %v377
    %v506 = vunpack.c.l.b16 %v378
    %v507 = vunpack.c.l.b16 %v379
    %v508 = vunpack.c.l.b16 %v380
    %v509 = vunpack.c.l.b16 %v381
    %v510 = vunpack.c.l.b16 %v382
    %v511 = vunpack.c.l.b16 %v383
    %v512 = vunpack.c.l.b16 %v384
    %v513 = vunpack.c.l.b16 %v385
    %v514 = vunpack.c.l.b16 %v386
    %v515 = vunpack.c.l.b16 %v387
    %v516 = vunpack.c.l.b16 %v388
    %v517 = vunpack.c.l.b16 %v389
    %v518 = vunpack.c.l.b16 %v390
    %v519 = vunpack.c.l.b16 %v391
    %v520 = vunpack.c.l.b16 %v392
    %v521 = vunpack.c.l.b16 %v393
    %v522 = vunpack.c.l.b16 %v394
    %v523 = vunpack.c.l.b16 %v395
    %v524 = vunpack.c.l.b16 %v396
    %v525 = vunpack.c.l.b16 %v397
    %v526 = vunpack.c.l.b16 %v398
    %v527 = vunpack.c.l.b16 %v399
    %v528 = vunpack.c.l.b16 %v400
    %v529 = vunpack.c.l.b16 %v401
    %v530 = vunpack.c.l.b16 %v402
    %v531 = vunpack.c.l.b16 %v403
    %v532 = vunpack.c.l.b16 %v404
    %v533 = vunpack.c.l.b16 %v405
    %v534 = vunpack.c.l.b16 %v406
    %v535 = vunpack.c.l.b16 %v407
    %v536 = vunpack.c.l.b16 %v408
    %v537 = vunpack.c.l.b16 %v409
    %v538 = vunpack.c.l.b16 %v410
    %v539 = vunpack.c.l.b16 %v411
    %v540 = vunpack.c.l.b16 %v412
    %v541 = vunpack.c.l.b16 %v413
    %v542 = vunpack.c.l.b16 %v414
    %v543 = vunpack.c.l.b16 %v415
    %v544 = vunpack.c.l.b16 %v416
    %v545 = vunpack.c.l.b16 %v417
    %v546 = vunpack.c.l.b16 %v418
    %v547 = vunpack.c.l.b16 %v419
    %v548 = vunpack.c.l.b16 %v420
    %v549 = vunpack.c.l.b16 %v421
    %v550 = vunpack.c.l.b16 %v422
    %v551 = vunpack.c.l.b16 %v423
    %v552 = vunpack.c.l.b16 %v424
    %v553 = vunpack.c.l.b16 %v425
    %v554 = vpack.c.b16 %v491, %v490
    %v555 = vpack.c.b16 %v493, %v492
    %v556 = vpack.c.b16 %v495, %v494
    %v557 = vpack.c.b16 %v497, %v496
    %v558 = vpack.c.b16 %v499, %v498
    %v559 = vpack.c.b16 %v501, %v500
    %v560 = vpack.c.b16 %v503, %v502
    %v561 = vpack.c.b16 %v505, %v504
    %v562 = vpack.c.b16 %v507, %v506
    %v563 = vpack.c.b16 %v509, %v508
    %v564 = vpack.c.b16 %v511, %v510
    %v565 = vpack.c.b16 %v513, %v512
    %v566 = vpack.c.b16 %v515, %v514
    %v567 = vpack.c.b16 %v517, %v516
    %v568 = vpack.c.b16 %v519, %v518
    %v569 = vpack.c.b16 %v521, %v520
    %v570 = vpack.c.b16 %v523, %v522
    %v571 = vpack.c.b16 %v525, %v524
    %v572 = vpack.c.b16 %v527, %v526
    %v573 = vpack.c.b16 %v529, %v528
    %v574 = vpack.c.b16 %v531, %v530
    %v575 = vpack.c.b16 %v533, %v532
    %v576 = vpack.c.b16 %v535, %v534
    %v577 = vpack.c.b16 %v537, %v536
    %v578 = vpack.c.b16 %v539, %v538
    %v579 = vpack.c.b16 %v541, %v540
    %v580 = vpack.c.b16 %v543, %v542
    %v581 = vpack.c.b16 %v545, %v544
    %v582 = vpack.c.b16 %v547, %v546
    %v583 = vpack.c.b16 %v549, %v548
    %v584 = vpack.c.b16 %v551, %v550
    %v585 = vpack.c.b16 %v553, %v552
    %618 = vmatprep.subr.bf16.mxu0 0
    %619 = vmatpush1.bf16.msra.mxu0 %v561
    %620 = vmatprep.subr.bf16.mxu0 0
    %621 = vmatpush1.bf16.msra.mxu0 %v560
    %622 = vmatprep.subr.bf16.mxu0 0
    %623 = vmatpush1.bf16.msra.mxu0 %v559
    %624 = vmatprep.subr.bf16.mxu0 0
    %625 = vmatpush1.bf16.msra.mxu0 %v558
    %626 = vmatprep.subr.bf16.mxu0 0
    %627 = vmatpush1.bf16.msra.mxu0 %v557
    %628 = vmatprep.subr.bf16.mxu0 0
    %629 = vmatpush1.bf16.msra.mxu0 %v556
    %630 = vmatprep.subr.bf16.mxu0 0
    %631 = vmatpush1.bf16.msra.mxu0 %v555
    %632 = vmatprep.subr.bf16.mxu0 0
    %633 = vmatpush1.bf16.msra.mxu0 %v554
    %634 = vmatprep.subr.bf16.mxu0 0
    %635 = vmatpush2.bf16.msra.mxu0 %v569
    %636 = vmatprep.subr.bf16.mxu0 0
    %637 = vmatpush2.bf16.msra.mxu0 %v568
    %638 = vmatprep.subr.bf16.mxu0 0
    %639 = vmatpush2.bf16.msra.mxu0 %v567
    %640 = vmatprep.subr.bf16.mxu0 0
    %641 = vmatpush2.bf16.msra.mxu0 %v566
    %642 = vmatprep.subr.bf16.mxu0 0
    %643 = vmatpush2.bf16.msra.mxu0 %v565
    %644 = vmatprep.subr.bf16.mxu0 0
    %645 = vmatpush2.bf16.msra.mxu0 %v564
    %646 = vmatprep.subr.bf16.mxu0 0
    %647 = vmatpush2.bf16.msra.mxu0 %v563
    %648 = vmatprep.subr.bf16.mxu0 0
    %649 = vmatpush2.bf16.msra.mxu0 %v562
    %650 = vmatprep.mubr.bf16.mxu0 %v166
    %651 = vmatmul.mubr.bf16.gmra.mxu0 %v165
    %v652 = vpop.f32.mrf.mxu0
    %v653 = vadd.f32 0.0, %v652
    %v654 = vpop.f32.mrf.mxu0
    %v655 = vpop.f32.mrf.mxu0
    %v656 = vadd.f32 0.0, %v655
    %v657 = vpop.f32.mrf.mxu0
    %658 = vmatprep.mubr.bf16.mxu0 %v170
    %659 = vmatmul.mubr.bf16.gmra.mxu0 %v169
    %v660 = vpop.f32.mrf.mxu0
    %v661 = vadd.f32 0.0, %v660
    %v662 = vpop.f32.mrf.mxu0
    %v663 = vpop.f32.mrf.mxu0
    %v664 = vadd.f32 0.0, %v663
    %v665 = vpop.f32.mrf.mxu0
    %666 = vmatprep.mubr.bf16.mxu0 %v174
    %667 = vmatmul.mubr.bf16.gmra.mxu0 %v173
    %v668 = vpop.f32.mrf.mxu0
    %v669 = vadd.f32 0.0, %v668
    %v670 = vpop.f32.mrf.mxu0
    %v671 = vpop.f32.mrf.mxu0
    %v672 = vadd.f32 0.0, %v671
    %v673 = vpop.f32.mrf.mxu0
    %674 = vmatprep.mubr.bf16.mxu0 %v178
    %675 = vmatmul.mubr.bf16.gmra.mxu0 %v177
    %v676 = vpop.f32.mrf.mxu0
    %v677 = vadd.f32 0.0, %v676
    %v678 = vpop.f32.mrf.mxu0
    %v679 = vpop.f32.mrf.mxu0
    %v680 = vadd.f32 0.0, %v679
    %v681 = vpop.f32.mrf.mxu0
    %682 = vmatprep.mubr.bf16.mxu0 %v182
    %683 = vmatmul.mubr.bf16.gmra.mxu0 %v181
    %v684 = vpop.f32.mrf.mxu0
    %v685 = vadd.f32 0.0, %v684
    %v686 = vpop.f32.mrf.mxu0
    %v687 = vpop.f32.mrf.mxu0
    %v688 = vadd.f32 0.0, %v687
    %v689 = vpop.f32.mrf.mxu0
    %690 = vmatprep.mubr.bf16.mxu0 %v186
    %691 = vmatmul.mubr.bf16.gmra.mxu0 %v185
    %v692 = vpop.f32.mrf.mxu0
    %v693 = vadd.f32 0.0, %v692
    %v694 = vpop.f32.mrf.mxu0
    %v695 = vpop.f32.mrf.mxu0
    %v696 = vadd.f32 0.0, %v695
    %v697 = vpop.f32.mrf.mxu0
    %698 = vmatprep.mubr.bf16.mxu0 %v190
    %699 = vmatmul.mubr.bf16.gmra.mxu0 %v189
    %v700 = vpop.f32.mrf.mxu0
    %v701 = vadd.f32 0.0, %v700
    %v702 = vpop.f32.mrf.mxu0
    %v703 = vpop.f32.mrf.mxu0
    %v704 = vadd.f32 0.0, %v703
    %v705 = vpop.f32.mrf.mxu0
    %706 = vmatprep.mubr.bf16.mxu0 %v194
    %707 = vmatmul.mubr.bf16.gmra.mxu0 %v193
    %v708 = vpop.f32.mrf.mxu0
    %v709 = vadd.f32 0.0, %v708
    %v710 = vpop.f32.mrf.mxu0
    %v711 = vpop.f32.mrf.mxu0
    %v712 = vadd.f32 0.0, %v711
    %v713 = vpop.f32.mrf.mxu0
    %714 = vmatprep.mubr.bf16.mxu0 %v198
    %715 = vmatmul.mubr.bf16.gmra.mxu0 %v197
    %v716 = vpop.f32.mrf.mxu0
    %v717 = vadd.f32 0.0, %v716
    %v718 = vpop.f32.mrf.mxu0
    %v719 = vpop.f32.mrf.mxu0
    %v720 = vadd.f32 0.0, %v719
    %v721 = vpop.f32.mrf.mxu0
    %722 = vmatprep.mubr.bf16.mxu0 %v202
    %723 = vmatmul.mubr.bf16.gmra.mxu0 %v201
    %v724 = vpop.f32.mrf.mxu0
    %v725 = vadd.f32 0.0, %v724
    %v726 = vpop.f32.mrf.mxu0
    %v727 = vpop.f32.mrf.mxu0
    %v728 = vadd.f32 0.0, %v727
    %v729 = vpop.f32.mrf.mxu0
    %730 = vmatprep.mubr.bf16.mxu0 %v206
    %731 = vmatmul.mubr.bf16.gmra.mxu0 %v205
    %v732 = vpop.f32.mrf.mxu0
    %v733 = vadd.f32 0.0, %v732
    %v734 = vpop.f32.mrf.mxu0
    %v735 = vpop.f32.mrf.mxu0
    %v736 = vadd.f32 0.0, %v735
    %v737 = vpop.f32.mrf.mxu0
    %738 = vmatprep.mubr.bf16.mxu0 %v210
    %739 = vmatmul.mubr.bf16.gmra.mxu0 %v209
    %v740 = vpop.f32.mrf.mxu0
    %v741 = vadd.f32 0.0, %v740
    %v742 = vpop.f32.mrf.mxu0
    %v743 = vpop.f32.mrf.mxu0
    %v744 = vadd.f32 0.0, %v743
    %v745 = vpop.f32.mrf.mxu0
    %746 = vmatprep.mubr.bf16.mxu0 %v214
    %747 = vmatmul.mubr.bf16.gmra.mxu0 %v213
    %v748 = vpop.f32.mrf.mxu0
    %v749 = vadd.f32 0.0, %v748
    %v750 = vpop.f32.mrf.mxu0
    %v751 = vpop.f32.mrf.mxu0
    %v752 = vadd.f32 0.0, %v751
    %v753 = vpop.f32.mrf.mxu0
    %754 = vmatprep.mubr.bf16.mxu0 %v218
    %755 = vmatmul.mubr.bf16.gmra.mxu0 %v217
    %v756 = vpop.f32.mrf.mxu0
    %v757 = vadd.f32 0.0, %v756
    %v758 = vpop.f32.mrf.mxu0
    %v759 = vpop.f32.mrf.mxu0
    %v760 = vadd.f32 0.0, %v759
    %v761 = vpop.f32.mrf.mxu0
    %762 = vmatprep.mubr.bf16.mxu0 %v222
    %763 = vmatmul.mubr.bf16.gmra.mxu0 %v221
    %v764 = vpop.f32.mrf.mxu0
    %v765 = vadd.f32 0.0, %v764
    %v766 = vpop.f32.mrf.mxu0
    %v767 = vpop.f32.mrf.mxu0
    %v768 = vadd.f32 0.0, %v767
    %v769 = vpop.f32.mrf.mxu0
    %770 = vmatprep.mubr.bf16.mxu0 %v226
    %771 = vmatmul.mubr.bf16.gmra.mxu0 %v225
    %v772 = vpop.f32.mrf.mxu0
    %v773 = vadd.f32 0.0, %v772
    %v774 = vpop.f32.mrf.mxu0
    %v775 = vpop.f32.mrf.mxu0
    %v776 = vadd.f32 0.0, %v775
    %v777 = vpop.f32.mrf.mxu0
    %778 = vmatprep.mubr.bf16.mxu0 %v230
    %779 = vmatmul.mubr.bf16.gmra.mxu0 %v229
    %v780 = vpop.f32.mrf.mxu0
    %v781 = vadd.f32 0.0, %v780
    %v782 = vpop.f32.mrf.mxu0
    %v783 = vpop.f32.mrf.mxu0
    %v784 = vadd.f32 0.0, %v783
    %v785 = vpop.f32.mrf.mxu0
    %786 = vmatprep.mubr.bf16.mxu0 %v234
    %787 = vmatmul.mubr.bf16.gmra.mxu0 %v233
    %v788 = vpop.f32.mrf.mxu0
    %v789 = vadd.f32 0.0, %v788
    %v790 = vpop.f32.mrf.mxu0
    %v791 = vpop.f32.mrf.mxu0
    %v792 = vadd.f32 0.0, %v791
    %v793 = vpop.f32.mrf.mxu0
    %794 = vmatprep.mubr.bf16.mxu0 %v238
    %795 = vmatmul.mubr.bf16.gmra.mxu0 %v237
    %v796 = vpop.f32.mrf.mxu0
    %v797 = vadd.f32 0.0, %v796
    %v798 = vpop.f32.mrf.mxu0
    %v799 = vpop.f32.mrf.mxu0
    %v800 = vadd.f32 0.0, %v799
    %v801 = vpop.f32.mrf.mxu0
    %802 = vmatprep.mubr.bf16.mxu0 %v242
    %803 = vmatmul.mubr.bf16.gmra.mxu0 %v241
    %v804 = vpop.f32.mrf.mxu0
    %v805 = vadd.f32 0.0, %v804
    %v806 = vpop.f32.mrf.mxu0
    %v807 = vpop.f32.mrf.mxu0
    %v808 = vadd.f32 0.0, %v807
    %v809 = vpop.f32.mrf.mxu0
    %810 = vmatprep.mubr.bf16.mxu0 %v246
    %811 = vmatmul.mubr.bf16.gmra.mxu0 %v245
    %v812 = vpop.f32.mrf.mxu0
    %v813 = vadd.f32 0.0, %v812
    %v814 = vpop.f32.mrf.mxu0
    %v815 = vpop.f32.mrf.mxu0
    %v816 = vadd.f32 0.0, %v815
    %v817 = vpop.f32.mrf.mxu0
    %818 = vmatprep.mubr.bf16.mxu0 %v250
    %819 = vmatmul.mubr.bf16.gmra.mxu0 %v249
    %v820 = vpop.f32.mrf.mxu0
    %v821 = vadd.f32 0.0, %v820
    %v822 = vpop.f32.mrf.mxu0
    %v823 = vpop.f32.mrf.mxu0
    %v824 = vadd.f32 0.0, %v823
    %v825 = vpop.f32.mrf.mxu0
    %826 = vmatprep.mubr.bf16.mxu0 %v254
    %827 = vmatmul.mubr.bf16.gmra.mxu0 %v253
    %v828 = vpop.f32.mrf.mxu0
    %v829 = vadd.f32 0.0, %v828
    %v830 = vpop.f32.mrf.mxu0
    %v831 = vpop.f32.mrf.mxu0
    %v832 = vadd.f32 0.0, %v831
    %v833 = vpop.f32.mrf.mxu0
    %834 = vmatprep.mubr.bf16.mxu0 %v258
    %835 = vmatmul.mubr.bf16.gmra.mxu0 %v257
    %v836 = vpop.f32.mrf.mxu0
    %v837 = vadd.f32 0.0, %v836
    %v838 = vpop.f32.mrf.mxu0
    %v839 = vpop.f32.mrf.mxu0
    %v840 = vadd.f32 0.0, %v839
    %v841 = vpop.f32.mrf.mxu0
    %842 = vmatprep.mubr.bf16.mxu0 %v262
    %843 = vmatmul.mubr.bf16.gmra.mxu0 %v261
    %v844 = vpop.f32.mrf.mxu0
    %v845 = vadd.f32 0.0, %v844
    %v846 = vpop.f32.mrf.mxu0
    %v847 = vpop.f32.mrf.mxu0
    %v848 = vadd.f32 0.0, %v847
    %v849 = vpop.f32.mrf.mxu0
    %850 = vmatprep.mubr.bf16.mxu0 %v266
    %851 = vmatmul.mubr.bf16.gmra.mxu0 %v265
    %v852 = vpop.f32.mrf.mxu0
    %v853 = vadd.f32 0.0, %v852
    %v854 = vpop.f32.mrf.mxu0
    %v855 = vpop.f32.mrf.mxu0
    %v856 = vadd.f32 0.0, %v855
    %v857 = vpop.f32.mrf.mxu0
    %858 = vmatprep.mubr.bf16.mxu0 %v270
    %859 = vmatmul.mubr.bf16.gmra.mxu0 %v269
    %v860 = vpop.f32.mrf.mxu0
    %v861 = vadd.f32 0.0, %v860
    %v862 = vpop.f32.mrf.mxu0
    %v863 = vpop.f32.mrf.mxu0
    %v864 = vadd.f32 0.0, %v863
    %v865 = vpop.f32.mrf.mxu0
    %866 = vmatprep.mubr.bf16.mxu0 %v274
    %867 = vmatmul.mubr.bf16.gmra.mxu0 %v273
    %v868 = vpop.f32.mrf.mxu0
    %v869 = vadd.f32 0.0, %v868
    %v870 = vpop.f32.mrf.mxu0
    %v871 = vpop.f32.mrf.mxu0
    %v872 = vadd.f32 0.0, %v871
    %v873 = vpop.f32.mrf.mxu0
    %874 = vmatprep.mubr.bf16.mxu0 %v278
    %875 = vmatmul.mubr.bf16.gmra.mxu0 %v277
    %v876 = vpop.f32.mrf.mxu0
    %v877 = vadd.f32 0.0, %v876
    %v878 = vpop.f32.mrf.mxu0
    %v879 = vpop.f32.mrf.mxu0
    %v880 = vadd.f32 0.0, %v879
    %v881 = vpop.f32.mrf.mxu0
    %882 = vmatprep.mubr.bf16.mxu0 %v282
    %883 = vmatmul.mubr.bf16.gmra.mxu0 %v281
    %v884 = vpop.f32.mrf.mxu0
    %v885 = vadd.f32 0.0, %v884
    %v886 = vpop.f32.mrf.mxu0
    %v887 = vpop.f32.mrf.mxu0
    %v888 = vadd.f32 0.0, %v887
    %v889 = vpop.f32.mrf.mxu0
    %890 = vmatprep.mubr.bf16.mxu0 %v286
    %891 = vmatmul.mubr.bf16.gmra.mxu0 %v285
    %v892 = vpop.f32.mrf.mxu0
    %v893 = vadd.f32 0.0, %v892
    %v894 = vpop.f32.mrf.mxu0
    %v895 = vpop.f32.mrf.mxu0
    %v896 = vadd.f32 0.0, %v895
    %v897 = vpop.f32.mrf.mxu0
    %898 = vmatprep.mubr.bf16.mxu0 %v290
    %899 = vmatmul.mubr.bf16.gmra.mxu0 %v289
    %v900 = vpop.f32.mrf.mxu0
    %v901 = vadd.f32 0.0, %v900
    %v902 = vpop.f32.mrf.mxu0
    %v903 = vpop.f32.mrf.mxu0
    %v904 = vadd.f32 0.0, %v903
    %v905 = vpop.f32.mrf.mxu0
    %906 = vdwg.mxu0
    %907 = vmatprep.subr.bf16.mxu0 0
    %908 = vmatpush1.bf16.msra.mxu0 %v577
    %909 = vmatprep.subr.bf16.mxu0 0
    %910 = vmatpush1.bf16.msra.mxu0 %v576
    %911 = vmatprep.subr.bf16.mxu0 0
    %912 = vmatpush1.bf16.msra.mxu0 %v575
    %913 = vmatprep.subr.bf16.mxu0 0
    %914 = vmatpush1.bf16.msra.mxu0 %v574
    %915 = vmatprep.subr.bf16.mxu0 0
    %916 = vmatpush1.bf16.msra.mxu0 %v573
    %917 = vmatprep.subr.bf16.mxu0 0
    %918 = vmatpush1.bf16.msra.mxu0 %v572
    %919 = vmatprep.subr.bf16.mxu0 0
    %920 = vmatpush1.bf16.msra.mxu0 %v571
    %921 = vmatprep.subr.bf16.mxu0 0
    %922 = vmatpush1.bf16.msra.mxu0 %v570
    %923 = vmatprep.subr.bf16.mxu0 0
    %924 = vmatpush2.bf16.msra.mxu0 %v585
    %925 = vmatprep.subr.bf16.mxu0 0
    %926 = vmatpush2.bf16.msra.mxu0 %v584
    %927 = vmatprep.subr.bf16.mxu0 0
    %928 = vmatpush2.bf16.msra.mxu0 %v583
    %929 = vmatprep.subr.bf16.mxu0 0
    %930 = vmatpush2.bf16.msra.mxu0 %v582
    %931 = vmatprep.subr.bf16.mxu0 0
    %932 = vmatpush2.bf16.msra.mxu0 %v581
    %933 = vmatprep.subr.bf16.mxu0 0
    %934 = vmatpush2.bf16.msra.mxu0 %v580
    %935 = vmatprep.subr.bf16.mxu0 0
    %936 = vmatpush2.bf16.msra.mxu0 %v579
    %937 = vmatprep.subr.bf16.mxu0 0
    %938 = vmatpush2.bf16.msra.mxu0 %v578
    %939 = vmatprep.mubr.bf16.mxu0 %v168
    %940 = vmatmul.mubr.bf16.gmra.mxu0 %v167
    %v941 = vpop.f32.mrf.mxu0
    %v942 = vadd.f32 %v653, %v941
    %v943 = vpop.f32.mrf.mxu0
    %v944 = vpop.f32.mrf.mxu0
    %v945 = vadd.f32 %v656, %v944
    %v946 = vpop.f32.mrf.mxu0
    %947 = vmatprep.mubr.bf16.mxu0 %v172
    %948 = vmatmul.mubr.bf16.gmra.mxu0 %v171
    %v949 = vpop.f32.mrf.mxu0
    %v950 = vadd.f32 %v661, %v949
    %v951 = vpop.f32.mrf.mxu0
    %v952 = vpop.f32.mrf.mxu0
    %v953 = vadd.f32 %v664, %v952
    %v954 = vpop.f32.mrf.mxu0
    %955 = vmatprep.mubr.bf16.mxu0 %v176
    %956 = vmatmul.mubr.bf16.gmra.mxu0 %v175
    %v957 = vpop.f32.mrf.mxu0
    %v958 = vadd.f32 %v669, %v957
    %v959 = vpop.f32.mrf.mxu0
    %v960 = vpop.f32.mrf.mxu0
    %v961 = vadd.f32 %v672, %v960
    %v962 = vpop.f32.mrf.mxu0
    %963 = vmatprep.mubr.bf16.mxu0 %v180
    %964 = vmatmul.mubr.bf16.gmra.mxu0 %v179
    %v965 = vpop.f32.mrf.mxu0
    %v966 = vadd.f32 %v677, %v965
    %v967 = vpop.f32.mrf.mxu0
    %v968 = vpop.f32.mrf.mxu0
    %v969 = vadd.f32 %v680, %v968
    %v970 = vpop.f32.mrf.mxu0
    %971 = vmatprep.mubr.bf16.mxu0 %v184
    %972 = vmatmul.mubr.bf16.gmra.mxu0 %v183
    %v973 = vpop.f32.mrf.mxu0
    %v974 = vadd.f32 %v685, %v973
    %v975 = vpop.f32.mrf.mxu0
    %v976 = vpop.f32.mrf.mxu0
    %v977 = vadd.f32 %v688, %v976
    %v978 = vpop.f32.mrf.mxu0
    %979 = vmatprep.mubr.bf16.mxu0 %v188
    %980 = vmatmul.mubr.bf16.gmra.mxu0 %v187
    %v981 = vpop.f32.mrf.mxu0
    %v982 = vadd.f32 %v693, %v981
    %v983 = vpop.f32.mrf.mxu0
    %v984 = vpop.f32.mrf.mxu0
    %v985 = vadd.f32 %v696, %v984
    %v986 = vpop.f32.mrf.mxu0
    %987 = vmatprep.mubr.bf16.mxu0 %v192
    %988 = vmatmul.mubr.bf16.gmra.mxu0 %v191
    %v989 = vpop.f32.mrf.mxu0
    %v990 = vadd.f32 %v701, %v989
    %v991 = vpop.f32.mrf.mxu0
    %v992 = vpop.f32.mrf.mxu0
    %v993 = vadd.f32 %v704, %v992
    %v994 = vpop.f32.mrf.mxu0
    %995 = vmatprep.mubr.bf16.mxu0 %v196
    %996 = vmatmul.mubr.bf16.gmra.mxu0 %v195
    %v997 = vpop.f32.mrf.mxu0
    %v998 = vadd.f32 %v709, %v997
    %v999 = vpop.f32.mrf.mxu0
    %v1000 = vpop.f32.mrf.mxu0
    %v1001 = vadd.f32 %v712, %v1000
    %v1002 = vpop.f32.mrf.mxu0
    %1003 = vmatprep.mubr.bf16.mxu0 %v200
    %1004 = vmatmul.mubr.bf16.gmra.mxu0 %v199
    %v1005 = vpop.f32.mrf.mxu0
    %v1006 = vadd.f32 %v717, %v1005
    %v1007 = vpop.f32.mrf.mxu0
    %v1008 = vpop.f32.mrf.mxu0
    %v1009 = vadd.f32 %v720, %v1008
    %v1010 = vpop.f32.mrf.mxu0
    %1011 = vmatprep.mubr.bf16.mxu0 %v204
    %1012 = vmatmul.mubr.bf16.gmra.mxu0 %v203
    %v1013 = vpop.f32.mrf.mxu0
    %v1014 = vadd.f32 %v725, %v1013
    %v1015 = vpop.f32.mrf.mxu0
    %v1016 = vpop.f32.mrf.mxu0
    %v1017 = vadd.f32 %v728, %v1016
    %v1018 = vpop.f32.mrf.mxu0
    %1019 = vmatprep.mubr.bf16.mxu0 %v208
    %1020 = vmatmul.mubr.bf16.gmra.mxu0 %v207
    %v1021 = vpop.f32.mrf.mxu0
    %v1022 = vadd.f32 %v733, %v1021
    %v1023 = vpop.f32.mrf.mxu0
    %v1024 = vpop.f32.mrf.mxu0
    %v1025 = vadd.f32 %v736, %v1024
    %v1026 = vpop.f32.mrf.mxu0
    %1027 = vmatprep.mubr.bf16.mxu0 %v212
    %1028 = vmatmul.mubr.bf16.gmra.mxu0 %v211
    %v1029 = vpop.f32.mrf.mxu0
    %v1030 = vadd.f32 %v741, %v1029
    %v1031 = vpop.f32.mrf.mxu0
    %v1032 = vpop.f32.mrf.mxu0
    %v1033 = vadd.f32 %v744, %v1032
    %v1034 = vpop.f32.mrf.mxu0
    %1035 = vmatprep.mubr.bf16.mxu0 %v216
    %1036 = vmatmul.mubr.bf16.gmra.mxu0 %v215
    %v1037 = vpop.f32.mrf.mxu0
    %v1038 = vadd.f32 %v749, %v1037
    %v1039 = vpop.f32.mrf.mxu0
    %v1040 = vpop.f32.mrf.mxu0
    %v1041 = vadd.f32 %v752, %v1040
    %v1042 = vpop.f32.mrf.mxu0
    %1043 = vmatprep.mubr.bf16.mxu0 %v220
    %1044 = vmatmul.mubr.bf16.gmra.mxu0 %v219
    %v1045 = vpop.f32.mrf.mxu0
    %v1046 = vadd.f32 %v757, %v1045
    %v1047 = vpop.f32.mrf.mxu0
    %v1048 = vpop.f32.mrf.mxu0
    %v1049 = vadd.f32 %v760, %v1048
    %v1050 = vpop.f32.mrf.mxu0
    %1051 = vmatprep.mubr.bf16.mxu0 %v224
    %1052 = vmatmul.mubr.bf16.gmra.mxu0 %v223
    %v1053 = vpop.f32.mrf.mxu0
    %v1054 = vadd.f32 %v765, %v1053
    %v1055 = vpop.f32.mrf.mxu0
    %v1056 = vpop.f32.mrf.mxu0
    %v1057 = vadd.f32 %v768, %v1056
    %v1058 = vpop.f32.mrf.mxu0
    %1059 = vmatprep.mubr.bf16.mxu0 %v228
    %1060 = vmatmul.mubr.bf16.gmra.mxu0 %v227
    %v1061 = vpop.f32.mrf.mxu0
    %v1062 = vadd.f32 %v773, %v1061
    %v1063 = vpop.f32.mrf.mxu0
    %v1064 = vpop.f32.mrf.mxu0
    %v1065 = vadd.f32 %v776, %v1064
    %v1066 = vpop.f32.mrf.mxu0
    %1067 = vmatprep.mubr.bf16.mxu0 %v232
    %1068 = vmatmul.mubr.bf16.gmra.mxu0 %v231
    %v1069 = vpop.f32.mrf.mxu0
    %v1070 = vadd.f32 %v781, %v1069
    %v1071 = vpop.f32.mrf.mxu0
    %v1072 = vpop.f32.mrf.mxu0
    %v1073 = vadd.f32 %v784, %v1072
    %v1074 = vpop.f32.mrf.mxu0
    %1075 = vmatprep.mubr.bf16.mxu0 %v236
    %1076 = vmatmul.mubr.bf16.gmra.mxu0 %v235
    %v1077 = vpop.f32.mrf.mxu0
    %v1078 = vadd.f32 %v789, %v1077
    %v1079 = vpop.f32.mrf.mxu0
    %v1080 = vpop.f32.mrf.mxu0
    %v1081 = vadd.f32 %v792, %v1080
    %v1082 = vpop.f32.mrf.mxu0
    %1083 = vmatprep.mubr.bf16.mxu0 %v240
    %1084 = vmatmul.mubr.bf16.gmra.mxu0 %v239
    %v1085 = vpop.f32.mrf.mxu0
    %v1086 = vadd.f32 %v797, %v1085
    %v1087 = vpop.f32.mrf.mxu0
    %v1088 = vpop.f32.mrf.mxu0
    %v1089 = vadd.f32 %v800, %v1088
    %v1090 = vpop.f32.mrf.mxu0
    %1091 = vmatprep.mubr.bf16.mxu0 %v244
    %1092 = vmatmul.mubr.bf16.gmra.mxu0 %v243
    %v1093 = vpop.f32.mrf.mxu0
    %v1094 = vadd.f32 %v805, %v1093
    %v1095 = vpop.f32.mrf.mxu0
    %v1096 = vpop.f32.mrf.mxu0
    %v1097 = vadd.f32 %v808, %v1096
    %v1098 = vpop.f32.mrf.mxu0
    %1099 = vmatprep.mubr.bf16.mxu0 %v248
    %1100 = vmatmul.mubr.bf16.gmra.mxu0 %v247
    %v1101 = vpop.f32.mrf.mxu0
    %v1102 = vadd.f32 %v813, %v1101
    %v1103 = vpop.f32.mrf.mxu0
    %v1104 = vpop.f32.mrf.mxu0
    %v1105 = vadd.f32 %v816, %v1104
    %v1106 = vpop.f32.mrf.mxu0
    %1107 = vmatprep.mubr.bf16.mxu0 %v252
    %1108 = vmatmul.mubr.bf16.gmra.mxu0 %v251
    %v1109 = vpop.f32.mrf.mxu0
    %v1110 = vadd.f32 %v821, %v1109
    %v1111 = vpop.f32.mrf.mxu0
    %v1112 = vpop.f32.mrf.mxu0
    %v1113 = vadd.f32 %v824, %v1112
    %v1114 = vpop.f32.mrf.mxu0
    %1115 = vmatprep.mubr.bf16.mxu0 %v256
    %1116 = vmatmul.mubr.bf16.gmra.mxu0 %v255
    %v1117 = vpop.f32.mrf.mxu0
    %v1118 = vadd.f32 %v829, %v1117
    %v1119 = vpop.f32.mrf.mxu0
    %v1120 = vpop.f32.mrf.mxu0
    %v1121 = vadd.f32 %v832, %v1120
    %v1122 = vpop.f32.mrf.mxu0
    %1123 = vmatprep.mubr.bf16.mxu0 %v260
    %1124 = vmatmul.mubr.bf16.gmra.mxu0 %v259
    %v1125 = vpop.f32.mrf.mxu0
    %v1126 = vadd.f32 %v837, %v1125
    %v1127 = vpop.f32.mrf.mxu0
    %v1128 = vpop.f32.mrf.mxu0
    %v1129 = vadd.f32 %v840, %v1128
    %v1130 = vpop.f32.mrf.mxu0
    %1131 = vmatprep.mubr.bf16.mxu0 %v264
    %1132 = vmatmul.mubr.bf16.gmra.mxu0 %v263
    %v1133 = vpop.f32.mrf.mxu0
    %v1134 = vadd.f32 %v845, %v1133
    %v1135 = vpop.f32.mrf.mxu0
    %v1136 = vpop.f32.mrf.mxu0
    %v1137 = vadd.f32 %v848, %v1136
    %v1138 = vpop.f32.mrf.mxu0
    %1139 = vmatprep.mubr.bf16.mxu0 %v268
    %1140 = vmatmul.mubr.bf16.gmra.mxu0 %v267
    %v1141 = vpop.f32.mrf.mxu0
    %v1142 = vadd.f32 %v853, %v1141
    %v1143 = vpop.f32.mrf.mxu0
    %v1144 = vpop.f32.mrf.mxu0
    %v1145 = vadd.f32 %v856, %v1144
    %v1146 = vpop.f32.mrf.mxu0
    %1147 = vmatprep.mubr.bf16.mxu0 %v272
    %1148 = vmatmul.mubr.bf16.gmra.mxu0 %v271
    %v1149 = vpop.f32.mrf.mxu0
    %v1150 = vadd.f32 %v861, %v1149
    %v1151 = vpop.f32.mrf.mxu0
    %v1152 = vpop.f32.mrf.mxu0
    %v1153 = vadd.f32 %v864, %v1152
    %v1154 = vpop.f32.mrf.mxu0
    %1155 = vmatprep.mubr.bf16.mxu0 %v276
    %1156 = vmatmul.mubr.bf16.gmra.mxu0 %v275
    %v1157 = vpop.f32.mrf.mxu0
    %v1158 = vadd.f32 %v869, %v1157
    %v1159 = vpop.f32.mrf.mxu0
    %v1160 = vpop.f32.mrf.mxu0
    %v1161 = vadd.f32 %v872, %v1160
    %v1162 = vpop.f32.mrf.mxu0
    %1163 = vmatprep.mubr.bf16.mxu0 %v280
    %1164 = vmatmul.mubr.bf16.gmra.mxu0 %v279
    %v1165 = vpop.f32.mrf.mxu0
    %v1166 = vadd.f32 %v877, %v1165
    %v1167 = vpop.f32.mrf.mxu0
    %v1168 = vpop.f32.mrf.mxu0
    %v1169 = vadd.f32 %v880, %v1168
    %v1170 = vpop.f32.mrf.mxu0
    %1171 = vmatprep.mubr.bf16.mxu0 %v284
    %1172 = vmatmul.mubr.bf16.gmra.mxu0 %v283
    %v1173 = vpop.f32.mrf.mxu0
    %v1174 = vadd.f32 %v885, %v1173
    %v1175 = vpop.f32.mrf.mxu0
    %v1176 = vpop.f32.mrf.mxu0
    %v1177 = vadd.f32 %v888, %v1176
    %v1178 = vpop.f32.mrf.mxu0
    %1179 = vmatprep.mubr.bf16.mxu0 %v288
    %1180 = vmatmul.mubr.bf16.gmra.mxu0 %v287
    %v1181 = vpop.f32.mrf.mxu0
    %v1182 = vadd.f32 %v893, %v1181
    %v1183 = vpop.f32.mrf.mxu0
    %v1184 = vpop.f32.mrf.mxu0
    %v1185 = vadd.f32 %v896, %v1184
    %v1186 = vpop.f32.mrf.mxu0
    %1187 = vmatprep.mubr.bf16.mxu0 %v292
    %1188 = vmatmul.mubr.bf16.gmra.mxu0 %v291
    %v1189 = vpop.f32.mrf.mxu0
    %v1190 = vadd.f32 %v901, %v1189
    %v1191 = vpop.f32.mrf.mxu0
    %v1192 = vpop.f32.mrf.mxu0
    %v1193 = vadd.f32 %v904, %v1192
    %v1194 = vpop.f32.mrf.mxu0
    %1195 = vdwg.mxu0
    %v1196 = vadd.f32 %v294, %v942
    %v1197 = vadd.f32 %v295, %v945
    %v1198 = vadd.f32 %v296, %v950
    %v1199 = vadd.f32 %v297, %v953
    %v1200 = vadd.f32 %v298, %v958
    %v1201 = vadd.f32 %v299, %v961
    %v1202 = vadd.f32 %v300, %v966
    %v1203 = vadd.f32 %v301, %v969
    %v1204 = vadd.f32 %v302, %v974
    %v1205 = vadd.f32 %v303, %v977
    %v1206 = vadd.f32 %v304, %v982
    %v1207 = vadd.f32 %v305, %v985
    %v1208 = vadd.f32 %v306, %v990
    %v1209 = vadd.f32 %v307, %v993
    %v1210 = vadd.f32 %v308, %v998
    %v1211 = vadd.f32 %v309, %v1001
    %v1212 = vadd.f32 %v310, %v1006
    %v1213 = vadd.f32 %v311, %v1009
    %v1214 = vadd.f32 %v312, %v1014
    %v1215 = vadd.f32 %v313, %v1017
    %v1216 = vadd.f32 %v314, %v1022
    %v1217 = vadd.f32 %v315, %v1025
    %v1218 = vadd.f32 %v316, %v1030
    %v1219 = vadd.f32 %v317, %v1033
    %v1220 = vadd.f32 %v318, %v1038
    %v1221 = vadd.f32 %v319, %v1041
    %v1222 = vadd.f32 %v320, %v1046
    %v1223 = vadd.f32 %v321, %v1049
    %v1224 = vadd.f32 %v322, %v1054
    %v1225 = vadd.f32 %v323, %v1057
    %v1226 = vadd.f32 %v324, %v1062
    %v1227 = vadd.f32 %v325, %v1065
    %v1228 = vadd.f32 %v326, %v1070
    %v1229 = vadd.f32 %v327, %v1073
    %v1230 = vadd.f32 %v328, %v1078
    %v1231 = vadd.f32 %v329, %v1081
    %v1232 = vadd.f32 %v330, %v1086
    %v1233 = vadd.f32 %v331, %v1089
    %v1234 = vadd.f32 %v332, %v1094
    %v1235 = vadd.f32 %v333, %v1097
    %v1236 = vadd.f32 %v334, %v1102
    %v1237 = vadd.f32 %v335, %v1105
    %v1238 = vadd.f32 %v336, %v1110
    %v1239 = vadd.f32 %v337, %v1113
    %v1240 = vadd.f32 %v338, %v1118
    %v1241 = vadd.f32 %v339, %v1121
    %v1242 = vadd.f32 %v340, %v1126
    %v1243 = vadd.f32 %v341, %v1129
    %v1244 = vadd.f32 %v342, %v1134
    %v1245 = vadd.f32 %v343, %v1137
    %v1246 = vadd.f32 %v344, %v1142
    %v1247 = vadd.f32 %v345, %v1145
    %v1248 = vadd.f32 %v346, %v1150
    %v1249 = vadd.f32 %v347, %v1153
    %v1250 = vadd.f32 %v348, %v1158
    %v1251 = vadd.f32 %v349, %v1161
    %v1252 = vadd.f32 %v350, %v1166
    %v1253 = vadd.f32 %v351, %v1169
    %v1254 = vadd.f32 %v352, %v1174
    %v1255 = vadd.f32 %v353, %v1177
    %v1256 = vadd.f32 %v354, %v1182
    %v1257 = vadd.f32 %v355, %v1185
    %v1258 = vadd.f32 %v356, %v1190
    %v1259 = vadd.f32 %v357, %v1193
    %1260 = vst [vmem:[#allocation2] sm:$0xff] %v1196
    %1261 = vst [vmem:[#allocation2 + $0x8] sm:$0xff] %v1197
    %1262 = vst [vmem:[#allocation2 + $0x10] sm:$0xff] %v1198
    %1263 = vst [vmem:[#allocation2 + $0x18] sm:$0xff] %v1199
    %1264 = vst [vmem:[#allocation2 + $0x20] sm:$0xff] %v1200
    %1265 = vst [vmem:[#allocation2 + $0x28] sm:$0xff] %v1201
    %1266 = vst [vmem:[#allocation2 + $0x30] sm:$0xff] %v1202
    %1267 = vst [vmem:[#allocation2 + $0x38] sm:$0xff] %v1203
    %1268 = vst [vmem:[#allocation2 + $0x40] sm:$0xff] %v1204
    %1269 = vst [vmem:[#allocation2 + $0x48] sm:$0xff] %v1205
    %1270 = vst [vmem:[#allocation2 + $0x50] sm:$0xff] %v1206
    %1271 = vst [vmem:[#allocation2 + $0x58] sm:$0xff] %v1207
    %1272 = vst [vmem:[#allocation2 + $0x60] sm:$0xff] %v1208
    %1273 = vst [vmem:[#allocation2 + $0x68] sm:$0xff] %v1209
    %1274 = vst [vmem:[#allocation2 + $0x70] sm:$0xff] %v1210
    %1275 = vst [vmem:[#allocation2 + $0x78] sm:$0xff] %v1211
    %1276 = vst [vmem:[#allocation2 + $0x80] sm:$0xff] %v1212
    %1277 = vst [vmem:[#allocation2 + $0x88] sm:$0xff] %v1213
    %1278 = vst [vmem:[#allocation2 + $0x90] sm:$0xff] %v1214
    %1279 = vst [vmem:[#allocation2 + $0x98] sm:$0xff] %v1215
    %1280 = vst [vmem:[#allocation2 + $0xa0] sm:$0xff] %v1216
    %1281 = vst [vmem:[#allocation2 + $0xa8] sm:$0xff] %v1217
    %1282 = vst [vmem:[#allocation2 + $0xb0] sm:$0xff] %v1218
    %1283 = vst [vmem:[#allocation2 + $0xb8] sm:$0xff] %v1219
    %1284 = vst [vmem:[#allocation2 + $0xc0] sm:$0xff] %v1220
    %1285 = vst [vmem:[#allocation2 + $0xc8] sm:$0xff] %v1221
    %1286 = vst [vmem:[#allocation2 + $0xd0] sm:$0xff] %v1222
    %1287 = vst [vmem:[#allocation2 + $0xd8] sm:$0xff] %v1223
    %1288 = vst [vmem:[#allocation2 + $0xe0] sm:$0xff] %v1224
    %1289 = vst [vmem:[#allocation2 + $0xe8] sm:$0xff] %v1225
    %1290 = vst [vmem:[#allocation2 + $0xf0] sm:$0xff] %v1226
    %1291 = vst [vmem:[#allocation2 + $0xf8] sm:$0xff] %v1227
    %1292 = vst [vmem:[#allocation2 + $0x100] sm:$0xff] %v1228
    %1293 = vst [vmem:[#allocation2 + $0x108] sm:$0xff] %v1229
    %1294 = vst [vmem:[#allocation2 + $0x110] sm:$0xff] %v1230
    %1295 = vst [vmem:[#allocation2 + $0x118] sm:$0xff] %v1231
    %1296 = vst [vmem:[#allocation2 + $0x120] sm:$0xff] %v1232
    %1297 = vst [vmem:[#allocation2 + $0x128] sm:$0xff] %v1233
    %1298 = vst [vmem:[#allocation2 + $0x130] sm:$0xff] %v1234
    %1299 = vst [vmem:[#allocation2 + $0x138] sm:$0xff] %v1235
    %1300 = vst [vmem:[#allocation2 + $0x140] sm:$0xff] %v1236
    %1301 = vst [vmem:[#allocation2 + $0x148] sm:$0xff] %v1237
    %1302 = vst [vmem:[#allocation2 + $0x150] sm:$0xff] %v1238
    %1303 = vst [vmem:[#allocation2 + $0x158] sm:$0xff] %v1239
    %1304 = vst [vmem:[#allocation2 + $0x160] sm:$0xff] %v1240
    %1305 = vst [vmem:[#allocation2 + $0x168] sm:$0xff] %v1241
    %1306 = vst [vmem:[#allocation2 + $0x170] sm:$0xff] %v1242
    %1307 = vst [vmem:[#allocation2 + $0x178] sm:$0xff] %v1243
    %1308 = vst [vmem:[#allocation2 + $0x180] sm:$0xff] %v1244
    %1309 = vst [vmem:[#allocation2 + $0x188] sm:$0xff] %v1245
    %1310 = vst [vmem:[#allocation2 + $0x190] sm:$0xff] %v1246
    %1311 = vst [vmem:[#allocation2 + $0x198] sm:$0xff] %v1247
    %1312 = vst [vmem:[#allocation2 + $0x1a0] sm:$0xff] %v1248
    %1313 = vst [vmem:[#allocation2 + $0x1a8] sm:$0xff] %v1249
    %1314 = vst [vmem:[#allocation2 + $0x1b0] sm:$0xff] %v1250
    %1315 = vst [vmem:[#allocation2 + $0x1b8] sm:$0xff] %v1251
    %1316 = vst [vmem:[#allocation2 + $0x1c0] sm:$0xff] %v1252
    %1317 = vst [vmem:[#allocation2 + $0x1c8] sm:$0xff] %v1253
    %1318 = vst [vmem:[#allocation2 + $0x1d0] sm:$0xff] %v1254
    %1319 = vst [vmem:[#allocation2 + $0x1d8] sm:$0xff] %v1255
    %1320 = vst [vmem:[#allocation2 + $0x1e0] sm:$0xff] %v1256
    %1321 = vst [vmem:[#allocation2 + $0x1e8] sm:$0xff] %v1257
    %1322 = vst [vmem:[#allocation2 + $0x1f0] sm:$0xff] %v1258
    %1323 = vst [vmem:[#allocation2 + $0x1f8] sm:$0xff] %v1259
    // Predicated region
    $region26: #{tpu_custom_call.1} parent=1 // pred_check
      %p1324 = pneg %p33
    $region27: #{tpu_custom_call.1} parent=1 // pred_check_branch
      %1326 = sbr.rel (%p1324) target = $region29
    $region28: #{tpu_custom_call.1} parent=1 // pred_region
      %v1327 = vld [vmem:[%s2] sm:$0xff]
      %v1328 = vld [vmem:[%s2 + $0x8] sm:$0xff]
      %v1329 = vld [vmem:[%s2 + $0x10] sm:$0xff]
      %v1330 = vld [vmem:[%s2 + $0x18] sm:$0xff]
      %v1331 = vld [vmem:[%s2 + $0x20] sm:$0xff]
      %v1332 = vld [vmem:[%s2 + $0x28] sm:$0xff]
      %v1333 = vld [vmem:[%s2 + $0x30] sm:$0xff]
      %v1334 = vld [vmem:[%s2 + $0x38] sm:$0xff]
      %v1335 = vld [vmem:[%s2 + $0x40] sm:$0xff]
      %v1336 = vld [vmem:[%s2 + $0x48] sm:$0xff]
      %v1337 = vld [vmem:[%s2 + $0x50] sm:$0xff]
      %v1338 = vld [vmem:[%s2 + $0x58] sm:$0xff]
      %v1339 = vld [vmem:[%s2 + $0x60] sm:$0xff]
      %v1340 = vld [vmem:[%s2 + $0x68] sm:$0xff]
      %v1341 = vld [vmem:[%s2 + $0x70] sm:$0xff]
      %v1342 = vld [vmem:[%s2 + $0x78] sm:$0xff]
      %v1343 = vld [vmem:[%s2 + $0x80] sm:$0xff]
      %v1344 = vld [vmem:[%s2 + $0x88] sm:$0xff]
      %v1345 = vld [vmem:[%s2 + $0x90] sm:$0xff]
      %v1346 = vld [vmem:[%s2 + $0x98] sm:$0xff]
      %v1347 = vld [vmem:[%s2 + $0xa0] sm:$0xff]
      %v1348 = vld [vmem:[%s2 + $0xa8] sm:$0xff]
      %v1349 = vld [vmem:[%s2 + $0xb0] sm:$0xff]
      %v1350 = vld [vmem:[%s2 + $0xb8] sm:$0xff]
      %v1351 = vld [vmem:[%s2 + $0xc0] sm:$0xff]
      %v1352 = vld [vmem:[%s2 + $0xc8] sm:$0xff]
      %v1353 = vld [vmem:[%s2 + $0xd0] sm:$0xff]
      %v1354 = vld [vmem:[%s2 + $0xd8] sm:$0xff]
      %v1355 = vld [vmem:[%s2 + $0xe0] sm:$0xff]
      %v1356 = vld [vmem:[%s2 + $0xe8] sm:$0xff]
      %v1357 = vld [vmem:[%s2 + $0xf0] sm:$0xff]
      %v1358 = vld [vmem:[%s2 + $0xf8] sm:$0xff]
      %v1359 = vld [vmem:[%s2 + $0x100] sm:$0xff]
      %v1360 = vld [vmem:[%s2 + $0x108] sm:$0xff]
      %v1361 = vld [vmem:[%s2 + $0x110] sm:$0xff]
      %v1362 = vld [vmem:[%s2 + $0x118] sm:$0xff]
      %v1363 = vld [vmem:[%s2 + $0x120] sm:$0xff]
      %v1364 = vld [vmem:[%s2 + $0x128] sm:$0xff]
      %v1365 = vld [vmem:[%s2 + $0x130] sm:$0xff]
      %v1366 = vld [vmem:[%s2 + $0x138] sm:$0xff]
      %v1367 = vld [vmem:[%s2 + $0x140] sm:$0xff]
      %v1368 = vld [vmem:[%s2 + $0x148] sm:$0xff]
      %v1369 = vld [vmem:[%s2 + $0x150] sm:$0xff]
      %v1370 = vld [vmem:[%s2 + $0x158] sm:$0xff]
      %v1371 = vld [vmem:[%s2 + $0x160] sm:$0xff]
      %v1372 = vld [vmem:[%s2 + $0x168] sm:$0xff]
      %v1373 = vld [vmem:[%s2 + $0x170] sm:$0xff]
      %v1374 = vld [vmem:[%s2 + $0x178] sm:$0xff]
      %v1375 = vld [vmem:[%s2 + $0x180] sm:$0xff]
      %v1376 = vld [vmem:[%s2 + $0x188] sm:$0xff]
      %v1377 = vld [vmem:[%s2 + $0x190] sm:$0xff]
      %v1378 = vld [vmem:[%s2 + $0x198] sm:$0xff]
      %v1379 = vld [vmem:[%s2 + $0x1a0] sm:$0xff]
      %v1380 = vld [vmem:[%s2 + $0x1a8] sm:$0xff]
      %v1381 = vld [vmem:[%s2 + $0x1b0] sm:$0xff]
      %v1382 = vld [vmem:[%s2 + $0x1b8] sm:$0xff]
      %v1383 = vld [vmem:[%s2 + $0x1c0] sm:$0xff]
      %v1384 = vld [vmem:[%s2 + $0x1c8] sm:$0xff]
      %v1385 = vld [vmem:[%s2 + $0x1d0] sm:$0xff]
      %v1386 = vld [vmem:[%s2 + $0x1d8] sm:$0xff]
      %v1387 = vld [vmem:[%s2 + $0x1e0] sm:$0xff]
      %v1388 = vld [vmem:[%s2 + $0x1e8] sm:$0xff]
      %v1389 = vld [vmem:[%s2 + $0x1f0] sm:$0xff]
      %v1390 = vld [vmem:[%s2 + $0x1f8] sm:$0xff]
      %v1391 = vld [vmem:[#allocation2] sm:$0xff]
      %v1392 = vld [vmem:[#allocation2 + $0x8] sm:$0xff]
      %v1393 = vld [vmem:[#allocation2 + $0x10] sm:$0xff]
      %v1394 = vld [vmem:[#allocation2 + $0x18] sm:$0xff]
      %v1395 = vld [vmem:[#allocation2 + $0x20] sm:$0xff]
      %v1396 = vld [vmem:[#allocation2 + $0x28] sm:$0xff]
      %v1397 = vld [vmem:[#allocation2 + $0x30] sm:$0xff]
      %v1398 = vld [vmem:[#allocation2 + $0x38] sm:$0xff]
      %v1399 = vld [vmem:[#allocation2 + $0x40] sm:$0xff]
      %v1400 = vld [vmem:[#allocation2 + $0x48] sm:$0xff]
      %v1401 = vld [vmem:[#allocation2 + $0x50] sm:$0xff]
      %v1402 = vld [vmem:[#allocation2 + $0x58] sm:$0xff]
      %v1403 = vld [vmem:[#allocation2 + $0x60] sm:$0xff]
      %v1404 = vld [vmem:[#allocation2 + $0x68] sm:$0xff]
      %v1405 = vld [vmem:[#allocation2 + $0x70] sm:$0xff]
      %v1406 = vld [vmem:[#allocation2 + $0x78] sm:$0xff]
      %v1407 = vld [vmem:[#allocation2 + $0x80] sm:$0xff]
      %v1408 = vld [vmem:[#allocation2 + $0x88] sm:$0xff]
      %v1409 = vld [vmem:[#allocation2 + $0x90] sm:$0xff]
      %v1410 = vld [vmem:[#allocation2 + $0x98] sm:$0xff]
      %v1411 = vld [vmem:[#allocation2 + $0xa0] sm:$0xff]
      %v1412 = vld [vmem:[#allocation2 + $0xa8] sm:$0xff]
      %v1413 = vld [vmem:[#allocation2 + $0xb0] sm:$0xff]
      %v1414 = vld [vmem:[#allocation2 + $0xb8] sm:$0xff]
      %v1415 = vld [vmem:[#allocation2 + $0xc0] sm:$0xff]
      %v1416 = vld [vmem:[#allocation2 + $0xc8] sm:$0xff]
      %v1417 = vld [vmem:[#allocation2 + $0xd0] sm:$0xff]
      %v1418 = vld [vmem:[#allocation2 + $0xd8] sm:$0xff]
      %v1419 = vld [vmem:[#allocation2 + $0xe0] sm:$0xff]
      %v1420 = vld [vmem:[#allocation2 + $0xe8] sm:$0xff]
      %v1421 = vld [vmem:[#allocation2 + $0xf0] sm:$0xff]
      %v1422 = vld [vmem:[#allocation2 + $0xf8] sm:$0xff]
      %v1423 = vld [vmem:[#allocation2 + $0x100] sm:$0xff]
      %v1424 = vld [vmem:[#allocation2 + $0x108] sm:$0xff]
      %v1425 = vld [vmem:[#allocation2 + $0x110] sm:$0xff]
      %v1426 = vld [vmem:[#allocation2 + $0x118] sm:$0xff]
      %v1427 = vld [vmem:[#allocation2 + $0x120] sm:$0xff]
      %v1428 = vld [vmem:[#allocation2 + $0x128] sm:$0xff]
      %v1429 = vld [vmem:[#allocation2 + $0x130] sm:$0xff]
      %v1430 = vld [vmem:[#allocation2 + $0x138] sm:$0xff]
      %v1431 = vld [vmem:[#allocation2 + $0x140] sm:$0xff]
      %v1432 = vld [vmem:[#allocation2 + $0x148] sm:$0xff]
      %v1433 = vld [vmem:[#allocation2 + $0x150] sm:$0xff]
      %v1434 = vld [vmem:[#allocation2 + $0x158] sm:$0xff]
      %v1435 = vld [vmem:[#allocation2 + $0x160] sm:$0xff]
      %v1436 = vld [vmem:[#allocation2 + $0x168] sm:$0xff]
      %v1437 = vld [vmem:[#allocation2 + $0x170] sm:$0xff]
      %v1438 = vld [vmem:[#allocation2 + $0x178] sm:$0xff]
      %v1439 = vld [vmem:[#allocation2 + $0x180] sm:$0xff]
      %v1440 = vld [vmem:[#allocation2 + $0x188] sm:$0xff]
      %v1441 = vld [vmem:[#allocation2 + $0x190] sm:$0xff]
      %v1442 = vld [vmem:[#allocation2 + $0x198] sm:$0xff]
      %v1443 = vld [vmem:[#allocation2 + $0x1a0] sm:$0xff]
      %v1444 = vld [vmem:[#allocation2 + $0x1a8] sm:$0xff]
      %v1445 = vld [vmem:[#allocation2 + $0x1b0] sm:$0xff]
      %v1446 = vld [vmem:[#allocation2 + $0x1b8] sm:$0xff]
      %v1447 = vld [vmem:[#allocation2 + $0x1c0] sm:$0xff]
      %v1448 = vld [vmem:[#allocation2 + $0x1c8] sm:$0xff]
      %v1449 = vld [vmem:[#allocation2 + $0x1d0] sm:$0xff]
      %v1450 = vld [vmem:[#allocation2 + $0x1d8] sm:$0xff]
      %v1451 = vld [vmem:[#allocation2 + $0x1e0] sm:$0xff]
      %v1452 = vld [vmem:[#allocation2 + $0x1e8] sm:$0xff]
      %v1453 = vld [vmem:[#allocation2 + $0x1f0] sm:$0xff]
      %v1454 = vld [vmem:[#allocation2 + $0x1f8] sm:$0xff]
      %1456 = vset.pattern.permute.xlu0 0
      %1457 = vperm.xlu0 %1456, %v1327
      %v1458 = vpop.permute.xlu0 %1457
      %1461 = vset.pattern.permute.xlu0 0
      %1462 = vperm.xlu0 %1461, %v1328
      %v1463 = vpop.permute.xlu0 %1462
      %1466 = vset.pattern.permute.xlu0 0
      %1467 = vperm.xlu0 %1466, %v1329
      %v1468 = vpop.permute.xlu0 %1467
      %1471 = vset.pattern.permute.xlu0 0
      %1472 = vperm.xlu0 %1471, %v1330
      %v1473 = vpop.permute.xlu0 %1472
      %1476 = vset.pattern.permute.xlu0 0
      %1477 = vperm.xlu0 %1476, %v1331
      %v1478 = vpop.permute.xlu0 %1477
      %1481 = vset.pattern.permute.xlu0 0
      %1482 = vperm.xlu0 %1481, %v1332
      %v1483 = vpop.permute.xlu0 %1482
      %1486 = vset.pattern.permute.xlu0 0
      %1487 = vperm.xlu0 %1486, %v1333
      %v1488 = vpop.permute.xlu0 %1487
      %1491 = vset.pattern.permute.xlu0 0
      %1492 = vperm.xlu0 %1491, %v1334
      %v1493 = vpop.permute.xlu0 %1492
      %1496 = vset.pattern.permute.xlu0 0
      %1497 = vperm.xlu0 %1496, %v1335
      %v1498 = vpop.permute.xlu0 %1497
      %1501 = vset.pattern.permute.xlu0 0
      %1502 = vperm.xlu0 %1501, %v1336
      %v1503 = vpop.permute.xlu0 %1502
      %1506 = vset.pattern.permute.xlu0 0
      %1507 = vperm.xlu0 %1506, %v1337
      %v1508 = vpop.permute.xlu0 %1507
      %1511 = vset.pattern.permute.xlu0 0
      %1512 = vperm.xlu0 %1511, %v1338
      %v1513 = vpop.permute.xlu0 %1512
      %1516 = vset.pattern.permute.xlu0 0
      %1517 = vperm.xlu0 %1516, %v1339
      %v1518 = vpop.permute.xlu0 %1517
      %1521 = vset.pattern.permute.xlu0 0
      %1522 = vperm.xlu0 %1521, %v1340
      %v1523 = vpop.permute.xlu0 %1522
      %1526 = vset.pattern.permute.xlu0 0
      %1527 = vperm.xlu0 %1526, %v1341
      %v1528 = vpop.permute.xlu0 %1527
      %1531 = vset.pattern.permute.xlu0 0
      %1532 = vperm.xlu0 %1531, %v1342
      %v1533 = vpop.permute.xlu0 %1532
      %1536 = vset.pattern.permute.xlu0 0
      %1537 = vperm.xlu0 %1536, %v1343
      %v1538 = vpop.permute.xlu0 %1537
      %1541 = vset.pattern.permute.xlu0 0
      %1542 = vperm.xlu0 %1541, %v1344
      %v1543 = vpop.permute.xlu0 %1542
      %1546 = vset.pattern.permute.xlu0 0
      %1547 = vperm.xlu0 %1546, %v1345
      %v1548 = vpop.permute.xlu0 %1547
      %1551 = vset.pattern.permute.xlu0 0
      %1552 = vperm.xlu0 %1551, %v1346
      %v1553 = vpop.permute.xlu0 %1552
      %1556 = vset.pattern.permute.xlu0 0
      %1557 = vperm.xlu0 %1556, %v1347
      %v1558 = vpop.permute.xlu0 %1557
      %1561 = vset.pattern.permute.xlu0 0
      %1562 = vperm.xlu0 %1561, %v1348
      %v1563 = vpop.permute.xlu0 %1562
      %1566 = vset.pattern.permute.xlu0 0
      %1567 = vperm.xlu0 %1566, %v1349
      %v1568 = vpop.permute.xlu0 %1567
      %1571 = vset.pattern.permute.xlu0 0
      %1572 = vperm.xlu0 %1571, %v1350
      %v1573 = vpop.permute.xlu0 %1572
      %1576 = vset.pattern.permute.xlu0 0
      %1577 = vperm.xlu0 %1576, %v1351
      %v1578 = vpop.permute.xlu0 %1577
      %1581 = vset.pattern.permute.xlu0 0
      %1582 = vperm.xlu0 %1581, %v1352
      %v1583 = vpop.permute.xlu0 %1582
      %1586 = vset.pattern.permute.xlu0 0
      %1587 = vperm.xlu0 %1586, %v1353
      %v1588 = vpop.permute.xlu0 %1587
      %1591 = vset.pattern.permute.xlu0 0
      %1592 = vperm.xlu0 %1591, %v1354
      %v1593 = vpop.permute.xlu0 %1592
      %1596 = vset.pattern.permute.xlu0 0
      %1597 = vperm.xlu0 %1596, %v1355
      %v1598 = vpop.permute.xlu0 %1597
      %1601 = vset.pattern.permute.xlu0 0
      %1602 = vperm.xlu0 %1601, %v1356
      %v1603 = vpop.permute.xlu0 %1602
      %1606 = vset.pattern.permute.xlu0 0
      %1607 = vperm.xlu0 %1606, %v1357
      %v1608 = vpop.permute.xlu0 %1607
      %1611 = vset.pattern.permute.xlu0 0
      %1612 = vperm.xlu0 %1611, %v1358
      %v1613 = vpop.permute.xlu0 %1612
      %1616 = vset.pattern.permute.xlu0 0
      %1617 = vperm.xlu0 %1616, %v1359
      %v1618 = vpop.permute.xlu0 %1617
      %1621 = vset.pattern.permute.xlu0 0
      %1622 = vperm.xlu0 %1621, %v1360
      %v1623 = vpop.permute.xlu0 %1622
      %1626 = vset.pattern.permute.xlu0 0
      %1627 = vperm.xlu0 %1626, %v1361
      %v1628 = vpop.permute.xlu0 %1627
      %1631 = vset.pattern.permute.xlu0 0
      %1632 = vperm.xlu0 %1631, %v1362
      %v1633 = vpop.permute.xlu0 %1632
      %1636 = vset.pattern.permute.xlu0 0
      %1637 = vperm.xlu0 %1636, %v1363
      %v1638 = vpop.permute.xlu0 %1637
      %1641 = vset.pattern.permute.xlu0 0
      %1642 = vperm.xlu0 %1641, %v1364
      %v1643 = vpop.permute.xlu0 %1642
      %1646 = vset.pattern.permute.xlu0 0
      %1647 = vperm.xlu0 %1646, %v1365
      %v1648 = vpop.permute.xlu0 %1647
      %1651 = vset.pattern.permute.xlu0 0
      %1652 = vperm.xlu0 %1651, %v1366
      %v1653 = vpop.permute.xlu0 %1652
      %1656 = vset.pattern.permute.xlu0 0
      %1657 = vperm.xlu0 %1656, %v1367
      %v1658 = vpop.permute.xlu0 %1657
      %1661 = vset.pattern.permute.xlu0 0
      %1662 = vperm.xlu0 %1661, %v1368
      %v1663 = vpop.permute.xlu0 %1662
      %1666 = vset.pattern.permute.xlu0 0
      %1667 = vperm.xlu0 %1666, %v1369
      %v1668 = vpop.permute.xlu0 %1667
      %1671 = vset.pattern.permute.xlu0 0
      %1672 = vperm.xlu0 %1671, %v1370
      %v1673 = vpop.permute.xlu0 %1672
      %1676 = vset.pattern.permute.xlu0 0
      %1677 = vperm.xlu0 %1676, %v1371
      %v1678 = vpop.permute.xlu0 %1677
      %1681 = vset.pattern.permute.xlu0 0
      %1682 = vperm.xlu0 %1681, %v1372
      %v1683 = vpop.permute.xlu0 %1682
      %1686 = vset.pattern.permute.xlu0 0
      %1687 = vperm.xlu0 %1686, %v1373
      %v1688 = vpop.permute.xlu0 %1687
      %1691 = vset.pattern.permute.xlu0 0
      %1692 = vperm.xlu0 %1691, %v1374
      %v1693 = vpop.permute.xlu0 %1692
      %1696 = vset.pattern.permute.xlu0 0
      %1697 = vperm.xlu0 %1696, %v1375
      %v1698 = vpop.permute.xlu0 %1697
      %1701 = vset.pattern.permute.xlu0 0
      %1702 = vperm.xlu0 %1701, %v1376
      %v1703 = vpop.permute.xlu0 %1702
      %1706 = vset.pattern.permute.xlu0 0
      %1707 = vperm.xlu0 %1706, %v1377
      %v1708 = vpop.permute.xlu0 %1707
      %1711 = vset.pattern.permute.xlu0 0
      %1712 = vperm.xlu0 %1711, %v1378
      %v1713 = vpop.permute.xlu0 %1712
      %1716 = vset.pattern.permute.xlu0 0
      %1717 = vperm.xlu0 %1716, %v1379
      %v1718 = vpop.permute.xlu0 %1717
      %1721 = vset.pattern.permute.xlu0 0
      %1722 = vperm.xlu0 %1721, %v1380
      %v1723 = vpop.permute.xlu0 %1722
      %1726 = vset.pattern.permute.xlu0 0
      %1727 = vperm.xlu0 %1726, %v1381
      %v1728 = vpop.permute.xlu0 %1727
      %1731 = vset.pattern.permute.xlu0 0
      %1732 = vperm.xlu0 %1731, %v1382
      %v1733 = vpop.permute.xlu0 %1732
      %1736 = vset.pattern.permute.xlu0 0
      %1737 = vperm.xlu0 %1736, %v1383
      %v1738 = vpop.permute.xlu0 %1737
      %1741 = vset.pattern.permute.xlu0 0
      %1742 = vperm.xlu0 %1741, %v1384
      %v1743 = vpop.permute.xlu0 %1742
      %1746 = vset.pattern.permute.xlu0 0
      %1747 = vperm.xlu0 %1746, %v1385
      %v1748 = vpop.permute.xlu0 %1747
      %1751 = vset.pattern.permute.xlu0 0
      %1752 = vperm.xlu0 %1751, %v1386
      %v1753 = vpop.permute.xlu0 %1752
      %1756 = vset.pattern.permute.xlu0 0
      %1757 = vperm.xlu0 %1756, %v1387
      %v1758 = vpop.permute.xlu0 %1757
      %1761 = vset.pattern.permute.xlu0 0
      %1762 = vperm.xlu0 %1761, %v1388
      %v1763 = vpop.permute.xlu0 %1762
      %1766 = vset.pattern.permute.xlu0 0
      %1767 = vperm.xlu0 %1766, %v1389
      %v1768 = vpop.permute.xlu0 %1767
      %1771 = vset.pattern.permute.xlu0 0
      %1772 = vperm.xlu0 %1771, %v1390
      %v1773 = vpop.permute.xlu0 %1772
      %v1775 = vmul.f32 %v1458, %v1391
      %v1776 = vmul.f32 %v1463, %v1392
      %v1777 = vmul.f32 %v1468, %v1393
      %v1778 = vmul.f32 %v1473, %v1394
      %v1779 = vmul.f32 %v1478, %v1395
      %v1780 = vmul.f32 %v1483, %v1396
      %v1781 = vmul.f32 %v1488, %v1397
      %v1782 = vmul.f32 %v1493, %v1398
      %v1783 = vmul.f32 %v1498, %v1399
      %v1784 = vmul.f32 %v1503, %v1400
      %v1785 = vmul.f32 %v1508, %v1401
      %v1786 = vmul.f32 %v1513, %v1402
      %v1787 = vmul.f32 %v1518, %v1403
      %v1788 = vmul.f32 %v1523, %v1404
      %v1789 = vmul.f32 %v1528, %v1405
      %v1790 = vmul.f32 %v1533, %v1406
      %v1791 = vmul.f32 %v1538, %v1407
      %v1792 = vmul.f32 %v1543, %v1408
      %v1793 = vmul.f32 %v1548, %v1409
      %v1794 = vmul.f32 %v1553, %v1410
      %v1795 = vmul.f32 %v1558, %v1411
      %v1796 = vmul.f32 %v1563, %v1412
      %v1797 = vmul.f32 %v1568, %v1413
      %v1798 = vmul.f32 %v1573, %v1414
      %v1799 = vmul.f32 %v1578, %v1415
      %v1800 = vmul.f32 %v1583, %v1416
      %v1801 = vmul.f32 %v1588, %v1417
      %v1802 = vmul.f32 %v1593, %v1418
      %v1803 = vmul.f32 %v1598, %v1419
      %v1804 = vmul.f32 %v1603, %v1420
      %v1805 = vmul.f32 %v1608, %v1421
      %v1806 = vmul.f32 %v1613, %v1422
      %v1807 = vmul.f32 %v1618, %v1423
      %v1808 = vmul.f32 %v1623, %v1424
      %v1809 = vmul.f32 %v1628, %v1425
      %v1810 = vmul.f32 %v1633, %v1426
      %v1811 = vmul.f32 %v1638, %v1427
      %v1812 = vmul.f32 %v1643, %v1428
      %v1813 = vmul.f32 %v1648, %v1429
      %v1814 = vmul.f32 %v1653, %v1430
      %v1815 = vmul.f32 %v1658, %v1431
      %v1816 = vmul.f32 %v1663, %v1432
      %v1817 = vmul.f32 %v1668, %v1433
      %v1818 = vmul.f32 %v1673, %v1434
      %v1819 = vmul.f32 %v1678, %v1435
      %v1820 = vmul.f32 %v1683, %v1436
      %v1821 = vmul.f32 %v1688, %v1437
      %v1822 = vmul.f32 %v1693, %v1438
      %v1823 = vmul.f32 %v1698, %v1439
      %v1824 = vmul.f32 %v1703, %v1440
      %v1825 = vmul.f32 %v1708, %v1441
      %v1826 = vmul.f32 %v1713, %v1442
      %v1827 = vmul.f32 %v1718, %v1443
      %v1828 = vmul.f32 %v1723, %v1444
      %v1829 = vmul.f32 %v1728, %v1445
      %v1830 = vmul.f32 %v1733, %v1446
      %v1831 = vmul.f32 %v1738, %v1447
      %v1832 = vmul.f32 %v1743, %v1448
      %v1833 = vmul.f32 %v1748, %v1449
      %v1834 = vmul.f32 %v1753, %v1450
      %v1835 = vmul.f32 %v1758, %v1451
      %v1836 = vmul.f32 %v1763, %v1452
      %v1837 = vmul.f32 %v1768, %v1453
      %v1838 = vmul.f32 %v1773, %v1454
      %v1839 = vld [vmem:[%s3] sm:$0x1]
      %v1841 = vlaneseq
      %v1842 = vshrl.u32 %v1841, 7
      %v1843 = vsub.s32 0, %v1842
      %v1844 = vrot.slane %v1839, %v1843
      %v1846 = vadd.f32 %v1775, %v1844
      %v1847 = vadd.f32 %v1776, %v1844
      %v1848 = vadd.f32 %v1777, %v1844
      %v1849 = vadd.f32 %v1778, %v1844
      %v1850 = vadd.f32 %v1779, %v1844
      %v1851 = vadd.f32 %v1780, %v1844
      %v1852 = vadd.f32 %v1781, %v1844
      %v1853 = vadd.f32 %v1782, %v1844
      %v1854 = vadd.f32 %v1783, %v1844
      %v1855 = vadd.f32 %v1784, %v1844
      %v1856 = vadd.f32 %v1785, %v1844
      %v1857 = vadd.f32 %v1786, %v1844
      %v1858 = vadd.f32 %v1787, %v1844
      %v1859 = vadd.f32 %v1788, %v1844
      %v1860 = vadd.f32 %v1789, %v1844
      %v1861 = vadd.f32 %v1790, %v1844
      %v1862 = vadd.f32 %v1791, %v1844
      %v1863 = vadd.f32 %v1792, %v1844
      %v1864 = vadd.f32 %v1793, %v1844
      %v1865 = vadd.f32 %v1794, %v1844
      %v1866 = vadd.f32 %v1795, %v1844
      %v1867 = vadd.f32 %v1796, %v1844
      %v1868 = vadd.f32 %v1797, %v1844
      %v1869 = vadd.f32 %v1798, %v1844
      %v1870 = vadd.f32 %v1799, %v1844
      %v1871 = vadd.f32 %v1800, %v1844
      %v1872 = vadd.f32 %v1801, %v1844
      %v1873 = vadd.f32 %v1802, %v1844
      %v1874 = vadd.f32 %v1803, %v1844
      %v1875 = vadd.f32 %v1804, %v1844
      %v1876 = vadd.f32 %v1805, %v1844
      %v1877 = vadd.f32 %v1806, %v1844
      %v1878 = vadd.f32 %v1807, %v1844
      %v1879 = vadd.f32 %v1808, %v1844
      %v1880 = vadd.f32 %v1809, %v1844
      %v1881 = vadd.f32 %v1810, %v1844
      %v1882 = vadd.f32 %v1811, %v1844
      %v1883 = vadd.f32 %v1812, %v1844
      %v1884 = vadd.f32 %v1813, %v1844
      %v1885 = vadd.f32 %v1814, %v1844
      %v1886 = vadd.f32 %v1815, %v1844
      %v1887 = vadd.f32 %v1816, %v1844
      %v1888 = vadd.f32 %v1817, %v1844
      %v1889 = vadd.f32 %v1818, %v1844
      %v1890 = vadd.f32 %v1819, %v1844
      %v1891 = vadd.f32 %v1820, %v1844
      %v1892 = vadd.f32 %v1821, %v1844
      %v1893 = vadd.f32 %v1822, %v1844
      %v1894 = vadd.f32 %v1823, %v1844
      %v1895 = vadd.f32 %v1824, %v1844
      %v1896 = vadd.f32 %v1825, %v1844
      %v1897 = vadd.f32 %v1826, %v1844
      %v1898 = vadd.f32 %v1827, %v1844
      %v1899 = vadd.f32 %v1828, %v1844
      %v1900 = vadd.f32 %v1829, %v1844
      %v1901 = vadd.f32 %v1830, %v1844
      %v1902 = vadd.f32 %v1831, %v1844
      %v1903 = vadd.f32 %v1832, %v1844
      %v1904 = vadd.f32 %v1833, %v1844
      %v1905 = vadd.f32 %v1834, %v1844
      %v1906 = vadd.f32 %v1835, %v1844
      %v1907 = vadd.f32 %v1836, %v1844
      %v1908 = vadd.f32 %v1837, %v1844
      %v1909 = vadd.f32 %v1838, %v1844
      %1910 = vst [vmem:[#allocation6] sm:$0xff] %v1846
      %1911 = vst [vmem:[#allocation6 + $0x8] sm:$0xff] %v1847
      %1912 = vst [vmem:[#allocation6 + $0x10] sm:$0xff] %v1848
      %1913 = vst [vmem:[#allocation6 + $0x18] sm:$0xff] %v1849
      %1914 = vst [vmem:[#allocation6 + $0x20] sm:$0xff] %v1850
      %1915 = vst [vmem:[#allocation6 + $0x28] sm:$0xff] %v1851
      %1916 = vst [vmem:[#allocation6 + $0x30] sm:$0xff] %v1852
      %1917 = vst [vmem:[#allocation6 + $0x38] sm:$0xff] %v1853
      %1918 = vst [vmem:[#allocation6 + $0x40] sm:$0xff] %v1854
      %1919 = vst [vmem:[#allocation6 + $0x48] sm:$0xff] %v1855
      %1920 = vst [vmem:[#allocation6 + $0x50] sm:$0xff] %v1856
      %1921 = vst [vmem:[#allocation6 + $0x58] sm:$0xff] %v1857
      %1922 = vst [vmem:[#allocation6 + $0x60] sm:$0xff] %v1858
      %1923 = vst [vmem:[#allocation6 + $0x68] sm:$0xff] %v1859
      %1924 = vst [vmem:[#allocation6 + $0x70] sm:$0xff] %v1860
      %1925 = vst [vmem:[#allocation6 + $0x78] sm:$0xff] %v1861
      %1926 = vst [vmem:[#allocation6 + $0x80] sm:$0xff] %v1862
      %1927 = vst [vmem:[#allocation6 + $0x88] sm:$0xff] %v1863
      %1928 = vst [vmem:[#allocation6 + $0x90] sm:$0xff] %v1864
      %1929 = vst [vmem:[#allocation6 + $0x98] sm:$0xff] %v1865
      %1930 = vst [vmem:[#allocation6 + $0xa0] sm:$0xff] %v1866
      %1931 = vst [vmem:[#allocation6 + $0xa8] sm:$0xff] %v1867
      %1932 = vst [vmem:[#allocation6 + $0xb0] sm:$0xff] %v1868
      %1933 = vst [vmem:[#allocation6 + $0xb8] sm:$0xff] %v1869
      %1934 = vst [vmem:[#allocation6 + $0xc0] sm:$0xff] %v1870
      %1935 = vst [vmem:[#allocation6 + $0xc8] sm:$0xff] %v1871
      %1936 = vst [vmem:[#allocation6 + $0xd0] sm:$0xff] %v1872
      %1937 = vst [vmem:[#allocation6 + $0xd8] sm:$0xff] %v1873
      %1938 = vst [vmem:[#allocation6 + $0xe0] sm:$0xff] %v1874
      %1939 = vst [vmem:[#allocation6 + $0xe8] sm:$0xff] %v1875
      %1940 = vst [vmem:[#allocation6 + $0xf0] sm:$0xff] %v1876
      %1941 = vst [vmem:[#allocation6 + $0xf8] sm:$0xff] %v1877
      %1942 = vst [vmem:[#allocation6 + $0x100] sm:$0xff] %v1878
      %1943 = vst [vmem:[#allocation6 + $0x108] sm:$0xff] %v1879
      %1944 = vst [vmem:[#allocation6 + $0x110] sm:$0xff] %v1880
      %1945 = vst [vmem:[#allocation6 + $0x118] sm:$0xff] %v1881
      %1946 = vst [vmem:[#allocation6 + $0x120] sm:$0xff] %v1882
      %1947 = vst [vmem:[#allocation6 + $0x128] sm:$0xff] %v1883
      %1948 = vst [vmem:[#allocation6 + $0x130] sm:$0xff] %v1884
      %1949 = vst [vmem:[#allocation6 + $0x138] sm:$0xff] %v1885
      %1950 = vst [vmem:[#allocation6 + $0x140] sm:$0xff] %v1886
      %1951 = vst [vmem:[#allocation6 + $0x148] sm:$0xff] %v1887
      %1952 = vst [vmem:[#allocation6 + $0x150] sm:$0xff] %v1888
      %1953 = vst [vmem:[#allocation6 + $0x158] sm:$0xff] %v1889
      %1954 = vst [vmem:[#allocation6 + $0x160] sm:$0xff] %v1890
      %1955 = vst [vmem:[#allocation6 + $0x168] sm:$0xff] %v1891
      %1956 = vst [vmem:[#allocation6 + $0x170] sm:$0xff] %v1892
      %1957 = vst [vmem:[#allocation6 + $0x178] sm:$0xff] %v1893
      %1958 = vst [vmem:[#allocation6 + $0x180] sm:$0xff] %v1894
      %1959 = vst [vmem:[#allocation6 + $0x188] sm:$0xff] %v1895
      %1960 = vst [vmem:[#allocation6 + $0x190] sm:$0xff] %v1896
      %1961 = vst [vmem:[#allocation6 + $0x198] sm:$0xff] %v1897
      %1962 = vst [vmem:[#allocation6 + $0x1a0] sm:$0xff] %v1898
      %1963 = vst [vmem:[#allocation6 + $0x1a8] sm:$0xff] %v1899
      %1964 = vst [vmem:[#allocation6 + $0x1b0] sm:$0xff] %v1900
      %1965 = vst [vmem:[#allocation6 + $0x1b8] sm:$0xff] %v1901
      %1966 = vst [vmem:[#allocation6 + $0x1c0] sm:$0xff] %v1902
      %1967 = vst [vmem:[#allocation6 + $0x1c8] sm:$0xff] %v1903
      %1968 = vst [vmem:[#allocation6 + $0x1d0] sm:$0xff] %v1904
      %1969 = vst [vmem:[#allocation6 + $0x1d8] sm:$0xff] %v1905
      %1970 = vst [vmem:[#allocation6 + $0x1e0] sm:$0xff] %v1906
      %1971 = vst [vmem:[#allocation6 + $0x1e8] sm:$0xff] %v1907
      %1972 = vst [vmem:[#allocation6 + $0x1f0] sm:$0xff] %v1908
      %1973 = vst [vmem:[#allocation6 + $0x1f8] sm:$0xff] %v1909
    $region29: #{tpu_custom_call.1} parent=1 // pred_fallthru
      _
    // Predicated region
    $region30: #{tpu_custom_call.1} parent=1 // pred_check
      _
    $region31: #{tpu_custom_call.1} parent=1 // pred_check_branch
      %1975 = sbr.rel (0) target = $region33
    $region32: #{tpu_custom_call.1} parent=1 // pred_region
      %s1977 = ssub.s32 8192, 8192
      %1978 = vsyncadd [#allocation5], %s1977
      %s1979 = sshll.u32 [#allocation6], 4
      %s1980 = int_to_ptr.vmem [resolvable:$true] %s1979
      %1985 = dma.vmem_to_hbm [thread:$0]  %s1980, 8192, %s4, [#allocation5], 128, 128, 8
    $region33: #{tpu_custom_call.1} parent=1 // pred_fallthru
      _
    // Predicated region
    $region34: #{tpu_custom_call.1} parent=1 // pred_check
      _
    $region35: #{tpu_custom_call.1} parent=1 // pred_check_branch
      %1987 = sbr.rel (0) target = $region37
    $region36: #{tpu_custom_call.1} parent=1 // pred_region
      %1988 = dma.done [#allocation5], 8192
    $region37: #{tpu_custom_call.1} parent=1 // pred_fallthru
      _
    %1989 = vsyncpa [#allocation4], 1
    %1990 = vsyncpa [#allocation5], 1

</llo_original>
